<compile_context>
chip_gen: v7x
topology: tpu7x:2x2x1
jax: 0.10.0
libtpu: 0.0.40
codegen_flags: <defaults>
</compile_context>

<pallas_src>
import functools

import jax
import jax.numpy as jnp
from jax.experimental import pallas as pl
from jax.experimental.pallas import tpu as pltpu

LN_EPS = 1e-5
IN_DIM = 512
LANE = 128


def _round_up(x, m):
    return ((x + m - 1) // m) * m


def _linear_ln_relu(h, w_ref, b_ref, g_ref, beta_ref):
    """fc -> LayerNorm -> (dropout=identity) -> relu.

    The dot runs in the operands' dtype with f32 accumulation; everything
    after the matmul is f32. Gamma is folded into the rsqrt scale.
    """
    y = jnp.dot(h, w_ref[...], preferred_element_type=jnp.float32) + b_ref[...]
    mu = jnp.mean(y, axis=-1, keepdims=True)
    yc = y - mu
    var = jnp.mean(yc * yc, axis=-1, keepdims=True)
    scale = g_ref[...] * jax.lax.rsqrt(var + LN_EPS)
    return jnp.maximum(yc * scale + beta_ref[...], 0.0)


def layernorm_net_kernel(
    x_ref,
    w1_ref, b1_ref, g1_ref, be1_ref,
    w2_ref, b2_ref, g2_ref, be2_ref,
    w4_ref, b4_ref, g4_ref, be4_ref,
    w5_ref, b5_ref, g5_ref, be5_ref,
    w3_ref, b3_ref,
    o_ref,
):
    # fc1 in x's native dtype (bf16 MXU fast path if x is bf16), f32 accumulate.
    h = _linear_ln_relu(x_ref[...], w1_ref, b1_ref, g1_ref, be1_ref)   # fc1->ln1->relu
    h = _linear_ln_relu(h, w2_ref, b2_ref, g2_ref, be2_ref)            # fc2->ln2->relu
    h = _linear_ln_relu(h, w4_ref, b4_ref, g4_ref, be4_ref)            # fc4->ln4->relu
    h = _linear_ln_relu(h, w5_ref, b5_ref, g5_ref, be5_ref)            # fc5->ln5->relu
    out = jnp.dot(h, w3_ref[...], preferred_element_type=jnp.float32) + b3_ref[...]
    o_ref[...] = out.astype(o_ref.dtype)   # lane-dense (128-wide) store


def prepare_params(params, x_dtype=jnp.float32):
    """One-time (hoisted) weight prep: pad fc3 to a 128-lane output and match
    w1's dtype to x so fc1 uses the MXU fast path when x is bf16."""
    out_dim = params["w3"].shape[1]
    out_pad = _round_up(max(out_dim, LANE), LANE)
    w3, b3 = params["w3"], params["b3"]
    if out_pad != out_dim:
        w3 = jnp.pad(w3, ((0, 0), (0, out_pad - out_dim)))
        b3 = jnp.pad(b3, ((0, 0), (0, out_pad - out_dim)))
    weight_args = (
        params["w1"].astype(x_dtype), params["b1"], params["g1"], params["be1"],
        params["w2"], params["b2"], params["g2"], params["be2"],
        params["w4"], params["b4"], params["g4"], params["be4"],
        params["w5"], params["b5"], params["g5"], params["be5"],
        w3, b3,
    )
    return weight_args, out_dim, out_pad


def _vmem_limit_bytes(est_bytes):
    """Raise the scoped VMEM limit only when needed; cap per generation."""
    if est_bytes <= 12 * 2**20:
        return None
    try:
        cap = pltpu.get_tpu_info().vmem_capacity_bytes
    except Exception:
        cap = 64 * 2**20   # conservative (v7x-sized) fallback
    ceiling = (cap * 3) // 4   # leave headroom for compiler scratch
    return int(min(2 * est_bytes, ceiling))


def layernorm_net_forward(x, prepared, *, batch_tile=4096,
                          out_dtype=jnp.float32, return_padded=False):
    """x: [B, 512] (f32 or bf16). prepared: output of prepare_params."""
    weight_args, out_dim, out_pad = prepared
    B, IN = x.shape
    assert IN == IN_DIM

    # Batch tiling. No padding of x: grid = cdiv(B, tile) and Pallas masks the
    # ragged last block. Clamp the tile so the grid has >= 2 steps whenever the
    # batch allows it (v7x megacore: "parallel" axis shards across both TCs).
    pb8 = _round_up(B, 8)
    tile = _round_up(min(batch_tile, pb8), 8)
    if pb8 >= 16:
        tile = min(tile, _round_up((pb8 + 1) // 2, 8))
    grid = pl.cdiv(B, tile)

    hidden = weight_args[0].shape[1]

    def full_spec(arr):
        # Grid-invariant full-array block: DMA'd once, stays resident in VMEM.
        return pl.BlockSpec(arr.shape, lambda i: (0, 0))

    in_specs = [pl.BlockSpec((tile, IN_DIM), lambda i: (i, 0))]
    in_specs += [full_spec(a) for a in weight_args]
    out_spec = pl.BlockSpec((tile, out_pad), lambda i: (i, 0))

    # VMEM estimate: double-buffered x / out tiles + resident params.
    x_bytes = 2 * tile * IN_DIM * x.dtype.itemsize
    o_bytes = 2 * tile * out_pad * jnp.dtype(out_dtype).itemsize
    p_bytes = 2 * sum(int(a.size) * a.dtype.itemsize for a in weight_args)
    vmem_limit = _vmem_limit_bytes(x_bytes + o_bytes + p_bytes)

    # Advisory cost estimate so XLA schedules neighbors around the call.
    flops = 2 * B * (IN_DIM * hidden + 3 * hidden * hidden + hidden * out_pad)
    bytes_accessed = (B * IN_DIM * x.dtype.itemsize
                      + B * out_pad * jnp.dtype(out_dtype).itemsize
                      + sum(int(a.size) * a.dtype.itemsize for a in weight_args))
    cost = pl.CostEstimate(flops=flops, transcendentals=4 * B,
                           bytes_accessed=bytes_accessed)

    out = pl.pallas_call(
        layernorm_net_kernel,
        out_shape=jax.ShapeDtypeStruct((B, out_pad), out_dtype),
        grid_spec=pltpu.PrefetchScalarGridSpec(
            num_scalar_prefetch=0,
            grid=(grid,),
            in_specs=in_specs,
            out_specs=out_spec,
        ),
        compiler_params=pltpu.CompilerParams(
            dimension_semantics=("parallel",),   # megacore-shardable on v7x
            vmem_limit_bytes=vmem_limit,
        ),
        cost_estimate=cost,
    )(x, *weight_args)

    if return_padded:
        return out
    return out[:, :out_dim]


def init_params(key, hidden_dim, out_dim):
    """Deterministic synthetic parameters (shapes follow LayerNormNet.__init__)."""
    ks = jax.random.split(key, 12)

    def lin(kw, kb, fan_in, fan_out):
        # PyTorch-style uniform(-1/sqrt(fan_in), 1/sqrt(fan_in)); stored as [in, out].
        bound = 1.0 / jnp.sqrt(fan_in)
        w = jax.random.uniform(kw, (fan_in, fan_out), jnp.float32, -bound, bound)
        b = jax.random.uniform(kb, (1, fan_out), jnp.float32, -bound, bound)
        return w, b

    w1, b1 = lin(ks[0], ks[1], IN_DIM, hidden_dim)
    w2, b2 = lin(ks[2], ks[3], hidden_dim, hidden_dim)
    w4, b4 = lin(ks[4], ks[5], hidden_dim, hidden_dim)
    w5, b5 = lin(ks[6], ks[7], hidden_dim, hidden_dim)
    w3, b3 = lin(ks[8], ks[9], hidden_dim, out_dim)

    ones = jnp.ones((1, hidden_dim), jnp.float32)
    zeros = jnp.zeros((1, hidden_dim), jnp.float32)
    return dict(
        w1=w1, b1=b1, g1=ones, be1=zeros,
        w2=w2, b2=b2, g2=ones, be2=zeros,
        w4=w4, b4=b4, g4=ones, be4=zeros,
        w5=w5, b5=b5, g5=ones, be5=zeros,
        w3=w3, b3=b3,
    )


def reference_forward(x, p):
    """Pure-JAX reference (dropout = identity / eval mode), high-precision matmuls."""
    dot = functools.partial(jnp.dot, precision=jax.lax.Precision.HIGHEST)

    def block(h, w, b, g, be):
        y = dot(h, w) + b
        mu = jnp.mean(y, axis=-1, keepdims=True)
        var = jnp.mean((y - mu) ** 2, axis=-1, keepdims=True)
        y = (y - mu) * jax.lax.rsqrt(var + LN_EPS) * g + be
        return jnp.maximum(y, 0.0)

    h = block(x, p["w1"], p["b1"], p["g1"], p["be1"])
    h = block(h, p["w2"], p["b2"], p["g2"], p["be2"])
    h = block(h, p["w4"], p["b4"], p["g4"], p["be4"])
    h = block(h, p["w5"], p["b5"], p["g5"], p["be5"])
    return dot(h, p["w3"]) + p["b3"]


if __name__ == "__main__":
    key = jax.random.PRNGKey(0)
    kx, kp = jax.random.split(key)

    # Small demo shapes; B=20 with batch_tile=8 deliberately exercises the
    # ragged-last-block (masked store) path and a multi-step (grid=3) pipeline.
    B, HIDDEN, OUT = 20, 32, 16
    x = jax.random.normal(kx, (B, IN_DIM), jnp.float32)
    params = init_params(kp, HIDDEN, OUT)

    prepared = prepare_params(params, x.dtype)   # hoisted, one-time weight prep
    out = layernorm_net_forward(x, prepared, batch_tile=8)
    out = jax.block_until_ready(out)

    ref = reference_forward(x, params)

    assert out.shape == (B, OUT)
    # Tolerance allows for MXU default matmul precision (vs HIGHEST-precision
    # reference); a wrong kernel would be off by O(0.1-1).
    assert jnp.allclose(out, ref, atol=2e-2, rtol=2e-2), "mismatch vs reference"
    print("KERNEL_OK")
</pallas_src>

<mosaic_0001>
module attributes {stable_mosaic.version = 11 : i64} {
  func.func @layernorm_net_kernel(%arg0: i32, %arg1: memref<8x512xf32, #tpu.memory_space<vmem>>, %arg2: memref<512x32xf32, #tpu.memory_space<vmem>>, %arg3: memref<1x32xf32, #tpu.memory_space<vmem>>, %arg4: memref<1x32xf32, #tpu.memory_space<vmem>>, %arg5: memref<1x32xf32, #tpu.memory_space<vmem>>, %arg6: memref<32x32xf32, #tpu.memory_space<vmem>>, %arg7: memref<1x32xf32, #tpu.memory_space<vmem>>, %arg8: memref<1x32xf32, #tpu.memory_space<vmem>>, %arg9: memref<1x32xf32, #tpu.memory_space<vmem>>, %arg10: memref<32x32xf32, #tpu.memory_space<vmem>>, %arg11: memref<1x32xf32, #tpu.memory_space<vmem>>, %arg12: memref<1x32xf32, #tpu.memory_space<vmem>>, %arg13: memref<1x32xf32, #tpu.memory_space<vmem>>, %arg14: memref<32x32xf32, #tpu.memory_space<vmem>>, %arg15: memref<1x32xf32, #tpu.memory_space<vmem>>, %arg16: memref<1x32xf32, #tpu.memory_space<vmem>>, %arg17: memref<1x32xf32, #tpu.memory_space<vmem>>, %arg18: memref<32x128xf32, #tpu.memory_space<vmem>>, %arg19: memref<1x128xf32, #tpu.memory_space<vmem>>, %arg20: memref<8x128xf32, #tpu.memory_space<vmem>>) attributes {dimension_semantics = [#tpu.dimension_semantics<parallel>], iteration_bounds = array<i64: 3>, scalar_prefetch = 0 : i64, scratch_operands = 0 : i64, tpu.core_type = #tpu.core_type<tc>, window_params = [{transform_indices = @transform_0, window_bounds = array<i64: 8, 512>}, {pipeline_mode = #tpu.pipeline_mode<synchronous>, transform_indices = @transform_1, window_bounds = array<i64: 512, 32>}, {pipeline_mode = #tpu.pipeline_mode<synchronous>, transform_indices = @transform_2, window_bounds = array<i64: 1, 32>}, {pipeline_mode = #tpu.pipeline_mode<synchronous>, transform_indices = @transform_3, window_bounds = array<i64: 1, 32>}, {pipeline_mode = #tpu.pipeline_mode<synchronous>, transform_indices = @transform_4, window_bounds = array<i64: 1, 32>}, {pipeline_mode = #tpu.pipeline_mode<synchronous>, transform_indices = @transform_5, window_bounds = array<i64: 32, 32>}, {pipeline_mode = #tpu.pipeline_mode<synchronous>, transform_indices = @transform_6, window_bounds = array<i64: 1, 32>}, {pipeline_mode = #tpu.pipeline_mode<synchronous>, transform_indices = @transform_7, window_bounds = array<i64: 1, 32>}, {pipeline_mode = #tpu.pipeline_mode<synchronous>, transform_indices = @transform_8, window_bounds = array<i64: 1, 32>}, {pipeline_mode = #tpu.pipeline_mode<synchronous>, transform_indices = @transform_9, window_bounds = array<i64: 32, 32>}, {pipeline_mode = #tpu.pipeline_mode<synchronous>, transform_indices = @transform_10, window_bounds = array<i64: 1, 32>}, {pipeline_mode = #tpu.pipeline_mode<synchronous>, transform_indices = @transform_11, window_bounds = array<i64: 1, 32>}, {pipeline_mode = #tpu.pipeline_mode<synchronous>, transform_indices = @transform_12, window_bounds = array<i64: 1, 32>}, {pipeline_mode = #tpu.pipeline_mode<synchronous>, transform_indices = @transform_13, window_bounds = array<i64: 32, 32>}, {pipeline_mode = #tpu.pipeline_mode<synchronous>, transform_indices = @transform_14, window_bounds = array<i64: 1, 32>}, {pipeline_mode = #tpu.pipeline_mode<synchronous>, transform_indices = @transform_15, window_bounds = array<i64: 1, 32>}, {pipeline_mode = #tpu.pipeline_mode<synchronous>, transform_indices = @transform_16, window_bounds = array<i64: 1, 32>}, {pipeline_mode = #tpu.pipeline_mode<synchronous>, transform_indices = @transform_17, window_bounds = array<i64: 32, 128>}, {pipeline_mode = #tpu.pipeline_mode<synchronous>, transform_indices = @transform_18, window_bounds = array<i64: 1, 128>}, {transform_indices = @transform_19, window_bounds = array<i64: 8, 128>}]} {
    %c0 = arith.constant 0 : index
    %c0_0 = arith.constant 0 : index
    %0 = vector.load %arg1[%c0, %c0_0] : memref<8x512xf32, #tpu.memory_space<vmem>>, vector<8x512xf32>
    %c0_1 = arith.constant 0 : index
    %c0_2 = arith.constant 0 : index
    %1 = vector.load %arg2[%c0_1, %c0_2] : memref<512x32xf32, #tpu.memory_space<vmem>>, vector<512x32xf32>
    %cst = arith.constant dense<0.000000e+00> : vector<8x32xf32>
    %2 = tpu.matmul %0, %1, %cst {dimension_numbers = #tpu.dot_dimension_numbers<[1], [0], [0], [1], [0, 0, 1, 1], [], []>} : vector<8x512xf32>, vector<512x32xf32>, vector<8x32xf32> -> vector<8x32xf32>
    %c0_3 = arith.constant 0 : index
    %c0_4 = arith.constant 0 : index
    %3 = vector.load %arg3[%c0_3, %c0_4] : memref<1x32xf32, #tpu.memory_space<vmem>>, vector<1x32xf32>
    %4 = vector.broadcast %3 : vector<1x32xf32> to vector<8x32xf32>
    %5 = arith.addf %2, %4 : vector<8x32xf32>
    %cst_5 = arith.constant dense<0.000000e+00> : vector<8xf32>
    %6 = vector.multi_reduction <add>, %5, %cst_5 [1] : vector<8x32xf32> to vector<8xf32>
    %7 = vector.shape_cast %6 : vector<8xf32> to vector<8x1xf32>
    %cst_6 = arith.constant 3.200000e+01 : f32
    %8 = vector.broadcast %cst_6 : f32 to vector<8x1xf32>
    %9 = arith.divf %7, %8 : vector<8x1xf32>
    %10 = vector.broadcast %9 : vector<8x1xf32> to vector<8x32xf32>
    %11 = arith.subf %5, %10 : vector<8x32xf32>
    %12 = arith.mulf %11, %11 : vector<8x32xf32>
    %cst_7 = arith.constant dense<0.000000e+00> : vector<8xf32>
    %13 = vector.multi_reduction <add>, %12, %cst_7 [1] : vector<8x32xf32> to vector<8xf32>
    %14 = vector.shape_cast %13 : vector<8xf32> to vector<8x1xf32>
    %cst_8 = arith.constant 3.200000e+01 : f32
    %15 = vector.broadcast %cst_8 : f32 to vector<8x1xf32>
    %16 = arith.divf %14, %15 : vector<8x1xf32>
    %c0_9 = arith.constant 0 : index
    %c0_10 = arith.constant 0 : index
    %17 = vector.load %arg4[%c0_9, %c0_10] : memref<1x32xf32, #tpu.memory_space<vmem>>, vector<1x32xf32>
    %cst_11 = arith.constant 9.99999974E-6 : f32
    %18 = vector.broadcast %cst_11 : f32 to vector<8x1xf32>
    %19 = arith.addf %16, %18 : vector<8x1xf32>
    %20 = math.rsqrt %19 : vector<8x1xf32>
    %21 = vector.broadcast %17 : vector<1x32xf32> to vector<8x32xf32>
    %22 = vector.broadcast %20 : vector<8x1xf32> to vector<8x32xf32>
    %23 = arith.mulf %21, %22 : vector<8x32xf32>
    %24 = arith.mulf %11, %23 : vector<8x32xf32>
    %c0_12 = arith.constant 0 : index
    %c0_13 = arith.constant 0 : index
    %25 = vector.load %arg5[%c0_12, %c0_13] : memref<1x32xf32, #tpu.memory_space<vmem>>, vector<1x32xf32>
    %26 = vector.broadcast %25 : vector<1x32xf32> to vector<8x32xf32>
    %27 = arith.addf %24, %26 : vector<8x32xf32>
    %cst_14 = arith.constant 0.000000e+00 : f32
    %28 = vector.broadcast %cst_14 : f32 to vector<8x32xf32>
    %29 = arith.maximumf %27, %28 : vector<8x32xf32>
    %c0_15 = arith.constant 0 : index
    %c0_16 = arith.constant 0 : index
    %30 = vector.load %arg6[%c0_15, %c0_16] : memref<32x32xf32, #tpu.memory_space<vmem>>, vector<32x32xf32>
    %cst_17 = arith.constant dense<0.000000e+00> : vector<8x32xf32>
    %31 = tpu.matmul %29, %30, %cst_17 {dimension_numbers = #tpu.dot_dimension_numbers<[1], [0], [0], [1], [0, 0, 1, 1], [], []>} : vector<8x32xf32>, vector<32x32xf32>, vector<8x32xf32> -> vector<8x32xf32>
    %c0_18 = arith.constant 0 : index
    %c0_19 = arith.constant 0 : index
    %32 = vector.load %arg7[%c0_18, %c0_19] : memref<1x32xf32, #tpu.memory_space<vmem>>, vector<1x32xf32>
    %33 = vector.broadcast %32 : vector<1x32xf32> to vector<8x32xf32>
    %34 = arith.addf %31, %33 : vector<8x32xf32>
    %cst_20 = arith.constant dense<0.000000e+00> : vector<8xf32>
    %35 = vector.multi_reduction <add>, %34, %cst_20 [1] : vector<8x32xf32> to vector<8xf32>
    %36 = vector.shape_cast %35 : vector<8xf32> to vector<8x1xf32>
    %cst_21 = arith.constant 3.200000e+01 : f32
    %37 = vector.broadcast %cst_21 : f32 to vector<8x1xf32>
    %38 = arith.divf %36, %37 : vector<8x1xf32>
    %39 = vector.broadcast %38 : vector<8x1xf32> to vector<8x32xf32>
    %40 = arith.subf %34, %39 : vector<8x32xf32>
    %41 = arith.mulf %40, %40 : vector<8x32xf32>
    %cst_22 = arith.constant dense<0.000000e+00> : vector<8xf32>
    %42 = vector.multi_reduction <add>, %41, %cst_22 [1] : vector<8x32xf32> to vector<8xf32>
    %43 = vector.shape_cast %42 : vector<8xf32> to vector<8x1xf32>
    %cst_23 = arith.constant 3.200000e+01 : f32
    %44 = vector.broadcast %cst_23 : f32 to vector<8x1xf32>
    %45 = arith.divf %43, %44 : vector<8x1xf32>
    %c0_24 = arith.constant 0 : index
    %c0_25 = arith.constant 0 : index
    %46 = vector.load %arg8[%c0_24, %c0_25] : memref<1x32xf32, #tpu.memory_space<vmem>>, vector<1x32xf32>
    %cst_26 = arith.constant 9.99999974E-6 : f32
    %47 = vector.broadcast %cst_26 : f32 to vector<8x1xf32>
    %48 = arith.addf %45, %47 : vector<8x1xf32>
    %49 = math.rsqrt %48 : vector<8x1xf32>
    %50 = vector.broadcast %46 : vector<1x32xf32> to vector<8x32xf32>
    %51 = vector.broadcast %49 : vector<8x1xf32> to vector<8x32xf32>
    %52 = arith.mulf %50, %51 : vector<8x32xf32>
    %53 = arith.mulf %40, %52 : vector<8x32xf32>
    %c0_27 = arith.constant 0 : index
    %c0_28 = arith.constant 0 : index
    %54 = vector.load %arg9[%c0_27, %c0_28] : memref<1x32xf32, #tpu.memory_space<vmem>>, vector<1x32xf32>
    %55 = vector.broadcast %54 : vector<1x32xf32> to vector<8x32xf32>
    %56 = arith.addf %53, %55 : vector<8x32xf32>
    %cst_29 = arith.constant 0.000000e+00 : f32
    %57 = vector.broadcast %cst_29 : f32 to vector<8x32xf32>
    %58 = arith.maximumf %56, %57 : vector<8x32xf32>
    %c0_30 = arith.constant 0 : index
    %c0_31 = arith.constant 0 : index
    %59 = vector.load %arg10[%c0_30, %c0_31] : memref<32x32xf32, #tpu.memory_space<vmem>>, vector<32x32xf32>
    %cst_32 = arith.constant dense<0.000000e+00> : vector<8x32xf32>
    %60 = tpu.matmul %58, %59, %cst_32 {dimension_numbers = #tpu.dot_dimension_numbers<[1], [0], [0], [1], [0, 0, 1, 1], [], []>} : vector<8x32xf32>, vector<32x32xf32>, vector<8x32xf32> -> vector<8x32xf32>
    %c0_33 = arith.constant 0 : index
    %c0_34 = arith.constant 0 : index
    %61 = vector.load %arg11[%c0_33, %c0_34] : memref<1x32xf32, #tpu.memory_space<vmem>>, vector<1x32xf32>
    %62 = vector.broadcast %61 : vector<1x32xf32> to vector<8x32xf32>
    %63 = arith.addf %60, %62 : vector<8x32xf32>
    %cst_35 = arith.constant dense<0.000000e+00> : vector<8xf32>
    %64 = vector.multi_reduction <add>, %63, %cst_35 [1] : vector<8x32xf32> to vector<8xf32>
    %65 = vector.shape_cast %64 : vector<8xf32> to vector<8x1xf32>
    %cst_36 = arith.constant 3.200000e+01 : f32
    %66 = vector.broadcast %cst_36 : f32 to vector<8x1xf32>
    %67 = arith.divf %65, %66 : vector<8x1xf32>
    %68 = vector.broadcast %67 : vector<8x1xf32> to vector<8x32xf32>
    %69 = arith.subf %63, %68 : vector<8x32xf32>
    %70 = arith.mulf %69, %69 : vector<8x32xf32>
    %cst_37 = arith.constant dense<0.000000e+00> : vector<8xf32>
    %71 = vector.multi_reduction <add>, %70, %cst_37 [1] : vector<8x32xf32> to vector<8xf32>
    %72 = vector.shape_cast %71 : vector<8xf32> to vector<8x1xf32>
    %cst_38 = arith.constant 3.200000e+01 : f32
    %73 = vector.broadcast %cst_38 : f32 to vector<8x1xf32>
    %74 = arith.divf %72, %73 : vector<8x1xf32>
    %c0_39 = arith.constant 0 : index
    %c0_40 = arith.constant 0 : index
    %75 = vector.load %arg12[%c0_39, %c0_40] : memref<1x32xf32, #tpu.memory_space<vmem>>, vector<1x32xf32>
    %cst_41 = arith.constant 9.99999974E-6 : f32
    %76 = vector.broadcast %cst_41 : f32 to vector<8x1xf32>
    %77 = arith.addf %74, %76 : vector<8x1xf32>
    %78 = math.rsqrt %77 : vector<8x1xf32>
    %79 = vector.broadcast %75 : vector<1x32xf32> to vector<8x32xf32>
    %80 = vector.broadcast %78 : vector<8x1xf32> to vector<8x32xf32>
    %81 = arith.mulf %79, %80 : vector<8x32xf32>
    %82 = arith.mulf %69, %81 : vector<8x32xf32>
    %c0_42 = arith.constant 0 : index
    %c0_43 = arith.constant 0 : index
    %83 = vector.load %arg13[%c0_42, %c0_43] : memref<1x32xf32, #tpu.memory_space<vmem>>, vector<1x32xf32>
    %84 = vector.broadcast %83 : vector<1x32xf32> to vector<8x32xf32>
    %85 = arith.addf %82, %84 : vector<8x32xf32>
    %cst_44 = arith.constant 0.000000e+00 : f32
    %86 = vector.broadcast %cst_44 : f32 to vector<8x32xf32>
    %87 = arith.maximumf %85, %86 : vector<8x32xf32>
    %c0_45 = arith.constant 0 : index
    %c0_46 = arith.constant 0 : index
    %88 = vector.load %arg14[%c0_45, %c0_46] : memref<32x32xf32, #tpu.memory_space<vmem>>, vector<32x32xf32>
    %cst_47 = arith.constant dense<0.000000e+00> : vector<8x32xf32>
    %89 = tpu.matmul %87, %88, %cst_47 {dimension_numbers = #tpu.dot_dimension_numbers<[1], [0], [0], [1], [0, 0, 1, 1], [], []>} : vector<8x32xf32>, vector<32x32xf32>, vector<8x32xf32> -> vector<8x32xf32>
    %c0_48 = arith.constant 0 : index
    %c0_49 = arith.constant 0 : index
    %90 = vector.load %arg15[%c0_48, %c0_49] : memref<1x32xf32, #tpu.memory_space<vmem>>, vector<1x32xf32>
    %91 = vector.broadcast %90 : vector<1x32xf32> to vector<8x32xf32>
    %92 = arith.addf %89, %91 : vector<8x32xf32>
    %cst_50 = arith.constant dense<0.000000e+00> : vector<8xf32>
    %93 = vector.multi_reduction <add>, %92, %cst_50 [1] : vector<8x32xf32> to vector<8xf32>
    %94 = vector.shape_cast %93 : vector<8xf32> to vector<8x1xf32>
    %cst_51 = arith.constant 3.200000e+01 : f32
    %95 = vector.broadcast %cst_51 : f32 to vector<8x1xf32>
    %96 = arith.divf %94, %95 : vector<8x1xf32>
    %97 = vector.broadcast %96 : vector<8x1xf32> to vector<8x32xf32>
    %98 = arith.subf %92, %97 : vector<8x32xf32>
    %99 = arith.mulf %98, %98 : vector<8x32xf32>
    %cst_52 = arith.constant dense<0.000000e+00> : vector<8xf32>
    %100 = vector.multi_reduction <add>, %99, %cst_52 [1] : vector<8x32xf32> to vector<8xf32>
    %101 = vector.shape_cast %100 : vector<8xf32> to vector<8x1xf32>
    %cst_53 = arith.constant 3.200000e+01 : f32
    %102 = vector.broadcast %cst_53 : f32 to vector<8x1xf32>
    %103 = arith.divf %101, %102 : vector<8x1xf32>
    %c0_54 = arith.constant 0 : index
    %c0_55 = arith.constant 0 : index
    %104 = vector.load %arg16[%c0_54, %c0_55] : memref<1x32xf32, #tpu.memory_space<vmem>>, vector<1x32xf32>
    %cst_56 = arith.constant 9.99999974E-6 : f32
    %105 = vector.broadcast %cst_56 : f32 to vector<8x1xf32>
    %106 = arith.addf %103, %105 : vector<8x1xf32>
    %107 = math.rsqrt %106 : vector<8x1xf32>
    %108 = vector.broadcast %104 : vector<1x32xf32> to vector<8x32xf32>
    %109 = vector.broadcast %107 : vector<8x1xf32> to vector<8x32xf32>
    %110 = arith.mulf %108, %109 : vector<8x32xf32>
    %111 = arith.mulf %98, %110 : vector<8x32xf32>
    %c0_57 = arith.constant 0 : index
    %c0_58 = arith.constant 0 : index
    %112 = vector.load %arg17[%c0_57, %c0_58] : memref<1x32xf32, #tpu.memory_space<vmem>>, vector<1x32xf32>
    %113 = vector.broadcast %112 : vector<1x32xf32> to vector<8x32xf32>
    %114 = arith.addf %111, %113 : vector<8x32xf32>
    %cst_59 = arith.constant 0.000000e+00 : f32
    %115 = vector.broadcast %cst_59 : f32 to vector<8x32xf32>
    %116 = arith.maximumf %114, %115 : vector<8x32xf32>
    %c0_60 = arith.constant 0 : index
    %c0_61 = arith.constant 0 : index
    %117 = vector.load %arg18[%c0_60, %c0_61] : memref<32x128xf32, #tpu.memory_space<vmem>>, vector<32x128xf32>
    %cst_62 = arith.constant dense<0.000000e+00> : vector<8x128xf32>
    %118 = tpu.matmul %116, %117, %cst_62 {dimension_numbers = #tpu.dot_dimension_numbers<[1], [0], [0], [1], [0, 0, 1, 1], [], []>} : vector<8x32xf32>, vector<32x128xf32>, vector<8x128xf32> -> vector<8x128xf32>
    %c0_63 = arith.constant 0 : index
    %c0_64 = arith.constant 0 : index
    %119 = vector.load %arg19[%c0_63, %c0_64] : memref<1x128xf32, #tpu.memory_space<vmem>>, vector<1x128xf32>
    %120 = vector.broadcast %119 : vector<1x128xf32> to vector<8x128xf32>
    %121 = arith.addf %118, %120 : vector<8x128xf32>
    %c0_65 = arith.constant 0 : index
    %c0_66 = arith.constant 0 : index
    %122 = vector.load %arg20[%c0_65, %c0_66] : memref<8x128xf32, #tpu.memory_space<vmem>>, vector<8x128xf32>
    tpu.vector_store %arg20[%c0_65, %c0_66], %121 {strides = array<i32>} : memref<8x128xf32, #tpu.memory_space<vmem>>, vector<8x128xf32>,
    return
  }
  func.func @transform_0(%arg0: i32) -> (i32, i32) {
    %c0_i32 = arith.constant 0 : i32
    %c0_i32_0 = arith.constant 0 : i32
    return %arg0, %c0_i32 : i32, i32
  }
  func.func @transform_1(%arg0: i32) -> (i32, i32) {
    %c0_i32 = arith.constant 0 : i32
    %c0_i32_0 = arith.constant 0 : i32
    %c0_i32_1 = arith.constant 0 : i32
    return %c0_i32, %c0_i32_0 : i32, i32
  }
  func.func @transform_2(%arg0: i32) -> (i32, i32) {
    %c0_i32 = arith.constant 0 : i32
    %c0_i32_0 = arith.constant 0 : i32
    %c0_i32_1 = arith.constant 0 : i32
    return %c0_i32, %c0_i32_0 : i32, i32
  }
  func.func @transform_3(%arg0: i32) -> (i32, i32) {
    %c0_i32 = arith.constant 0 : i32
    %c0_i32_0 = arith.constant 0 : i32
    %c0_i32_1 = arith.constant 0 : i32
    return %c0_i32, %c0_i32_0 : i32, i32
  }
  func.func @transform_4(%arg0: i32) -> (i32, i32) {
    %c0_i32 = arith.constant 0 : i32
    %c0_i32_0 = arith.constant 0 : i32
    %c0_i32_1 = arith.constant 0 : i32
    return %c0_i32, %c0_i32_0 : i32, i32
  }
  func.func @transform_5(%arg0: i32) -> (i32, i32) {
    %c0_i32 = arith.constant 0 : i32
    %c0_i32_0 = arith.constant 0 : i32
    %c0_i32_1 = arith.constant 0 : i32
    return %c0_i32, %c0_i32_0 : i32, i32
  }
  func.func @transform_6(%arg0: i32) -> (i32, i32) {
    %c0_i32 = arith.constant 0 : i32
    %c0_i32_0 = arith.constant 0 : i32
    %c0_i32_1 = arith.constant 0 : i32
    return %c0_i32, %c0_i32_0 : i32, i32
  }
  func.func @transform_7(%arg0: i32) -> (i32, i32) {
    %c0_i32 = arith.constant 0 : i32
    %c0_i32_0 = arith.constant 0 : i32
    %c0_i32_1 = arith.constant 0 : i32
    return %c0_i32, %c0_i32_0 : i32, i32
  }
  func.func @transform_8(%arg0: i32) -> (i32, i32) {
    %c0_i32 = arith.constant 0 : i32
    %c0_i32_0 = arith.constant 0 : i32
    %c0_i32_1 = arith.constant 0 : i32
    return %c0_i32, %c0_i32_0 : i32, i32
  }
  func.func @transform_9(%arg0: i32) -> (i32, i32) {
    %c0_i32 = arith.constant 0 : i32
    %c0_i32_0 = arith.constant 0 : i32
    %c0_i32_1 = arith.constant 0 : i32
    return %c0_i32, %c0_i32_0 : i32, i32
  }
  func.func @transform_10(%arg0: i32) -> (i32, i32) {
    %c0_i32 = arith.constant 0 : i32
    %c0_i32_0 = arith.constant 0 : i32
    %c0_i32_1 = arith.constant 0 : i32
    return %c0_i32, %c0_i32_0 : i32, i32
  }
  func.func @transform_11(%arg0: i32) -> (i32, i32) {
    %c0_i32 = arith.constant 0 : i32
    %c0_i32_0 = arith.constant 0 : i32
    %c0_i32_1 = arith.constant 0 : i32
    return %c0_i32, %c0_i32_0 : i32, i32
  }
  func.func @transform_12(%arg0: i32) -> (i32, i32) {
    %c0_i32 = arith.constant 0 : i32
    %c0_i32_0 = arith.constant 0 : i32
    %c0_i32_1 = arith.constant 0 : i32
    return %c0_i32, %c0_i32_0 : i32, i32
  }
  func.func @transform_13(%arg0: i32) -> (i32, i32) {
    %c0_i32 = arith.constant 0 : i32
    %c0_i32_0 = arith.constant 0 : i32
    %c0_i32_1 = arith.constant 0 : i32
    return %c0_i32, %c0_i32_0 : i32, i32
  }
  func.func @transform_14(%arg0: i32) -> (i32, i32) {
    %c0_i32 = arith.constant 0 : i32
    %c0_i32_0 = arith.constant 0 : i32
    %c0_i32_1 = arith.constant 0 : i32
    return %c0_i32, %c0_i32_0 : i32, i32
  }
  func.func @transform_15(%arg0: i32) -> (i32, i32) {
    %c0_i32 = arith.constant 0 : i32
    %c0_i32_0 = arith.constant 0 : i32
    %c0_i32_1 = arith.constant 0 : i32
    return %c0_i32, %c0_i32_0 : i32, i32
  }
  func.func @transform_16(%arg0: i32) -> (i32, i32) {
    %c0_i32 = arith.constant 0 : i32
    %c0_i32_0 = arith.constant 0 : i32
    %c0_i32_1 = arith.constant 0 : i32
    return %c0_i32, %c0_i32_0 : i32, i32
  }
  func.func @transform_17(%arg0: i32) -> (i32, i32) {
    %c0_i32 = arith.constant 0 : i32
    %c0_i32_0 = arith.constant 0 : i32
    %c0_i32_1 = arith.constant 0 : i32
    return %c0_i32, %c0_i32_0 : i32, i32
  }
  func.func @transform_18(%arg0: i32) -> (i32, i32) {
    %c0_i32 = arith.constant 0 : i32
    %c0_i32_0 = arith.constant 0 : i32
    %c0_i32_1 = arith.constant 0 : i32
    return %c0_i32, %c0_i32_0 : i32, i32
  }
  func.func @transform_19(%arg0: i32) -> (i32, i32) {
    %c0_i32 = arith.constant 0 : i32
    %c0_i32_0 = arith.constant 0 : i32
    return %arg0, %c0_i32 : i32, i32
  }
}

</mosaic_0001>

<llo_original>
// kernel: tpu_custom_call.1
$region0: #{tpu_custom_call.1}
  #allocation0 [shape = 'u32[]', space=smem, size = 0x4, offset = 0x4, fixed_abs, tag = 'smem constant byte address 0x4 - core index']
  #allocation1 [shape = 'u32[144,128]{1,0:T(1,128)}', space=vmem, size = 0x12000, scoped, tag = 'internal scratch']
  %s0 = inlined_call_operand.vmem [shape: f32[20,512], index: 0, kind: input, shape index: {}]
  %s1 = inlined_call_operand.vmem [shape: f32[512,32], index: 1, kind: input, shape index: {}]
  %s2 = inlined_call_operand.vmem [shape: f32[1,32], index: 2, kind: input, shape index: {}]
  %s3 = inlined_call_operand.vmem [shape: f32[1,32], index: 3, kind: input, shape index: {}]
  %s4 = inlined_call_operand.vmem [shape: f32[1,32], index: 4, kind: input, shape index: {}]
  %s5 = inlined_call_operand.vmem [shape: f32[32,32], index: 5, kind: input, shape index: {}]
  %s6 = inlined_call_operand.vmem [shape: f32[1,32], index: 6, kind: input, shape index: {}]
  %s7 = inlined_call_operand.vmem [shape: f32[1,32], index: 7, kind: input, shape index: {}]
  %s8 = inlined_call_operand.vmem [shape: f32[1,32], index: 8, kind: input, shape index: {}]
  %s9 = inlined_call_operand.vmem [shape: f32[32,32], index: 9, kind: input, shape index: {}]
  %s10 = inlined_call_operand.vmem [shape: f32[1,32], index: 10, kind: input, shape index: {}]
  %s11 = inlined_call_operand.vmem [shape: f32[1,32], index: 11, kind: input, shape index: {}]
  %s12 = inlined_call_operand.vmem [shape: f32[1,32], index: 12, kind: input, shape index: {}]
  %s13 = inlined_call_operand.vmem [shape: f32[32,32], index: 13, kind: input, shape index: {}]
  %s14 = inlined_call_operand.vmem [shape: f32[1,32], index: 14, kind: input, shape index: {}]
  %s15 = inlined_call_operand.vmem [shape: f32[1,32], index: 15, kind: input, shape index: {}]
  %s16 = inlined_call_operand.vmem [shape: f32[1,32], index: 16, kind: input, shape index: {}]
  %s17 = inlined_call_operand.vmem [shape: f32[32,128], index: 17, kind: input, shape index: {}]
  %s18 = inlined_call_operand.vmem [shape: f32[1,128], index: 18, kind: input, shape index: {}]
  %s19 = inlined_call_operand.hbm [shape: f32[20,128], index: 19, kind: output, shape index: {}]
  %s20 = sld [smem:[#allocation0]]
  $region109: #{tpu_custom_call.1} parent=0
    _
  %s22 = ssub.s32 1, %s20
  %s23 = scalar_select 0, %s22, %s20
  $region1: #{tpu_custom_call.1} parent=0
    #allocation2 [shape = 'u8[8192]{0}', space=vmem, size = 0x2000, scoped, tag = 'output window, operand 0']
    #allocation3 [shape = 's32[2]{0}', space=sflag, size = 0x8, scoped, tag = 'scoped memory for tpu_custom_call.1']
    %24 = vsyncpa [#allocation3], 0
    %s25 = scalar_lea.sflag [#allocation3], 1
    %26 = vsyncpa %s25, 0
    loop: start=0, step=1, limit=5
    $region2: #{tpu_custom_call.1} parent=1 // loop_pre_header
      _
    $region3: #{tpu_custom_call.1} parent=1 // loop_header
      %s28 = sphi 0, %s32
      %p29 = scmp.ge.s32.totalorder %s28, 5
      %s38 = sphi 0, %s40
      %s41 = sphi 0, %s38
      %s42 = sphi 0, %s41
      %s58 = sphi 0, %s42
      %s62 = sphi 0, %s62
      %s64 = sphi 0, %s62
      %s65 = sphi 0, %s64
      %s79 = sphi 0, %s65
      %s83 = sphi 0, %s83
      %s85 = sphi 0, %s83
      %s86 = sphi 0, %s85
      %s100 = sphi 0, %s86
      %s104 = sphi 0, %s104
      %s106 = sphi 0, %s104
      %s107 = sphi 0, %s106
      %s121 = sphi 0, %s107
      %s125 = sphi 0, %s125
      %s127 = sphi 0, %s125
      %s128 = sphi 0, %s127
      %s142 = sphi 0, %s128
      %s146 = sphi 0, %s146
      %s148 = sphi 0, %s146
      %s149 = sphi 0, %s148
      %s163 = sphi 0, %s149
      %s167 = sphi 0, %s167
      %s169 = sphi 0, %s167
      %s170 = sphi 0, %s169
      %s184 = sphi 0, %s170
      %s188 = sphi 0, %s188
      %s190 = sphi 0, %s188
      %s191 = sphi 0, %s190
      %s205 = sphi 0, %s191
      %s209 = sphi 0, %s209
      %s211 = sphi 0, %s209
      %s212 = sphi 0, %s211
      %s226 = sphi 0, %s212
      %s230 = sphi 0, %s230
      %s232 = sphi 0, %s230
      %s233 = sphi 0, %s232
      %s247 = sphi 0, %s233
      %s251 = sphi 0, %s251
      %s253 = sphi 0, %s251
      %s254 = sphi 0, %s253
      %s268 = sphi 0, %s254
      %s272 = sphi 0, %s272
      %s274 = sphi 0, %s272
      %s275 = sphi 0, %s274
      %s289 = sphi 0, %s275
      %s293 = sphi 0, %s293
      %s295 = sphi 0, %s293
      %s296 = sphi 0, %s295
      %s310 = sphi 0, %s296
      %s314 = sphi 0, %s314
      %s316 = sphi 0, %s314
      %s317 = sphi 0, %s316
      %s331 = sphi 0, %s317
      %s335 = sphi 0, %s335
      %s337 = sphi 0, %s335
      %s338 = sphi 0, %s337
      %s352 = sphi 0, %s338
      %s356 = sphi 0, %s356
      %s358 = sphi 0, %s356
      %s359 = sphi 0, %s358
      %s373 = sphi 0, %s359
      %s377 = sphi 0, %s377
      %s379 = sphi 0, %s377
      %s380 = sphi 0, %s379
      %s394 = sphi 0, %s380
      %s398 = sphi 0, %s398
      %s400 = sphi 0, %s398
      %s401 = sphi 0, %s400
      %s415 = sphi 0, %s401
      %s419 = sphi 0, %s419
      %s421 = sphi 0, %s419
      %s422 = sphi 0, %s421
      %s436 = sphi 0, %s422
      %s442 = sphi 0, %s444
      %s445 = sphi 0, %s442
      %s446 = sphi 0, %s445
      %s462 = sphi 0, %s446
    $region4: #{tpu_custom_call.1} parent=1 // loop_header_branch
      %31 = sbr.rel (%p29) target = $region8
    $region5: #{tpu_custom_call.1} parent=1 // loop_body
      %s33 = ssub.s32 %s28, 1
      %s34 = ssub.s32 %s28, 2
      %s35 = sadd.s32 %s28, 1
      %s36 = ssub.s32 %s28, %s35
      %p37 = scmp.eq.s32.totalorder %s36, 0
      %s39 = sadd.s32 %s38, 1
      %s40 = scalar_select %p37, %s38, %s39
      %p43 = pneg %p37
      %p44 = scmp.eq.s32.totalorder %s28, 2
      %p45 = por %p43, %p44
      %p46 = scmp.ne.s32.totalorder %s38, %s41
      %p47 = scmp.eq.s32.totalorder %s28, 0
      %p48 = por %p46, %p47
      %p49 = scmp.ne.s32.totalorder %s38, %s41
      %p50 = scmp.eq.s32.totalorder %s33, 2
      %p51 = por %p49, %p50
      %p52 = scmp.ne.s32.totalorder %s41, %s42
      %p53 = scmp.eq.s32.totalorder %s33, 0
      %p54 = por %p52, %p53
      %p55 = scmp.ne.s32.totalorder %s41, %s42
      %p56 = scmp.eq.s32.totalorder %s34, 2
      %p57 = por %p55, %p56
      %p59 = scmp.ne.s32.totalorder %s42, %s58
      %p60 = scmp.eq.s32.totalorder %s34, 0
      %p61 = por %p59, %p60
      %s63 = sadd.s32 %s62, 1
      %p66 = scmp.eq.s32.totalorder %s28, 2
      %p67 = scmp.ne.s32.totalorder %s62, %s64
      %p68 = scmp.eq.s32.totalorder %s28, 0
      %p69 = por %p67, %p68
      %p70 = scmp.ne.s32.totalorder %s62, %s64
      %p71 = scmp.eq.s32.totalorder %s33, 2
      %p72 = por %p70, %p71
      %p73 = scmp.ne.s32.totalorder %s64, %s65
      %p74 = scmp.eq.s32.totalorder %s33, 0
      %p75 = por %p73, %p74
      %p76 = scmp.ne.s32.totalorder %s64, %s65
      %p77 = scmp.eq.s32.totalorder %s34, 2
      %p78 = por %p76, %p77
      %p80 = scmp.ne.s32.totalorder %s65, %s79
      %p81 = scmp.eq.s32.totalorder %s34, 0
      %p82 = por %p80, %p81
      %s84 = sadd.s32 %s83, 1
      %p87 = scmp.eq.s32.totalorder %s28, 2
      %p88 = scmp.ne.s32.totalorder %s83, %s85
      %p89 = scmp.eq.s32.totalorder %s28, 0
      %p90 = por %p88, %p89
      %p91 = scmp.ne.s32.totalorder %s83, %s85
      %p92 = scmp.eq.s32.totalorder %s33, 2
      %p93 = por %p91, %p92
      %p94 = scmp.ne.s32.totalorder %s85, %s86
      %p95 = scmp.eq.s32.totalorder %s33, 0
      %p96 = por %p94, %p95
      %p97 = scmp.ne.s32.totalorder %s85, %s86
      %p98 = scmp.eq.s32.totalorder %s34, 2
      %p99 = por %p97, %p98
      %p101 = scmp.ne.s32.totalorder %s86, %s100
      %p102 = scmp.eq.s32.totalorder %s34, 0
      %p103 = por %p101, %p102
      %s105 = sadd.s32 %s104, 1
      %p108 = scmp.eq.s32.totalorder %s28, 2
      %p109 = scmp.ne.s32.totalorder %s104, %s106
      %p110 = scmp.eq.s32.totalorder %s28, 0
      %p111 = por %p109, %p110
      %p112 = scmp.ne.s32.totalorder %s104, %s106
      %p113 = scmp.eq.s32.totalorder %s33, 2
      %p114 = por %p112, %p113
      %p115 = scmp.ne.s32.totalorder %s106, %s107
      %p116 = scmp.eq.s32.totalorder %s33, 0
      %p117 = por %p115, %p116
      %p118 = scmp.ne.s32.totalorder %s106, %s107
      %p119 = scmp.eq.s32.totalorder %s34, 2
      %p120 = por %p118, %p119
      %p122 = scmp.ne.s32.totalorder %s107, %s121
      %p123 = scmp.eq.s32.totalorder %s34, 0
      %p124 = por %p122, %p123
      %s126 = sadd.s32 %s125, 1
      %p129 = scmp.eq.s32.totalorder %s28, 2
      %p130 = scmp.ne.s32.totalorder %s125, %s127
      %p131 = scmp.eq.s32.totalorder %s28, 0
      %p132 = por %p130, %p131
      %p133 = scmp.ne.s32.totalorder %s125, %s127
      %p134 = scmp.eq.s32.totalorder %s33, 2
      %p135 = por %p133, %p134
      %p136 = scmp.ne.s32.totalorder %s127, %s128
      %p137 = scmp.eq.s32.totalorder %s33, 0
      %p138 = por %p136, %p137
      %p139 = scmp.ne.s32.totalorder %s127, %s128
      %p140 = scmp.eq.s32.totalorder %s34, 2
      %p141 = por %p139, %p140
      %p143 = scmp.ne.s32.totalorder %s128, %s142
      %p144 = scmp.eq.s32.totalorder %s34, 0
      %p145 = por %p143, %p144
      %s147 = sadd.s32 %s146, 1
      %p150 = scmp.eq.s32.totalorder %s28, 2
      %p151 = scmp.ne.s32.totalorder %s146, %s148
      %p152 = scmp.eq.s32.totalorder %s28, 0
      %p153 = por %p151, %p152
      %p154 = scmp.ne.s32.totalorder %s146, %s148
      %p155 = scmp.eq.s32.totalorder %s33, 2
      %p156 = por %p154, %p155
      %p157 = scmp.ne.s32.totalorder %s148, %s149
      %p158 = scmp.eq.s32.totalorder %s33, 0
      %p159 = por %p157, %p158
      %p160 = scmp.ne.s32.totalorder %s148, %s149
      %p161 = scmp.eq.s32.totalorder %s34, 2
      %p162 = por %p160, %p161
      %p164 = scmp.ne.s32.totalorder %s149, %s163
      %p165 = scmp.eq.s32.totalorder %s34, 0
      %p166 = por %p164, %p165
      %s168 = sadd.s32 %s167, 1
      %p171 = scmp.eq.s32.totalorder %s28, 2
      %p172 = scmp.ne.s32.totalorder %s167, %s169
      %p173 = scmp.eq.s32.totalorder %s28, 0
      %p174 = por %p172, %p173
      %p175 = scmp.ne.s32.totalorder %s167, %s169
      %p176 = scmp.eq.s32.totalorder %s33, 2
      %p177 = por %p175, %p176
      %p178 = scmp.ne.s32.totalorder %s169, %s170
      %p179 = scmp.eq.s32.totalorder %s33, 0
      %p180 = por %p178, %p179
      %p181 = scmp.ne.s32.totalorder %s169, %s170
      %p182 = scmp.eq.s32.totalorder %s34, 2
      %p183 = por %p181, %p182
      %p185 = scmp.ne.s32.totalorder %s170, %s184
      %p186 = scmp.eq.s32.totalorder %s34, 0
      %p187 = por %p185, %p186
      %s189 = sadd.s32 %s188, 1
      %p192 = scmp.eq.s32.totalorder %s28, 2
      %p193 = scmp.ne.s32.totalorder %s188, %s190
      %p194 = scmp.eq.s32.totalorder %s28, 0
      %p195 = por %p193, %p194
      %p196 = scmp.ne.s32.totalorder %s188, %s190
      %p197 = scmp.eq.s32.totalorder %s33, 2
      %p198 = por %p196, %p197
      %p199 = scmp.ne.s32.totalorder %s190, %s191
      %p200 = scmp.eq.s32.totalorder %s33, 0
      %p201 = por %p199, %p200
      %p202 = scmp.ne.s32.totalorder %s190, %s191
      %p203 = scmp.eq.s32.totalorder %s34, 2
      %p204 = por %p202, %p203
      %p206 = scmp.ne.s32.totalorder %s191, %s205
      %p207 = scmp.eq.s32.totalorder %s34, 0
      %p208 = por %p206, %p207
      %s210 = sadd.s32 %s209, 1
      %p213 = scmp.eq.s32.totalorder %s28, 2
      %p214 = scmp.ne.s32.totalorder %s209, %s211
      %p215 = scmp.eq.s32.totalorder %s28, 0
      %p216 = por %p214, %p215
      %p217 = scmp.ne.s32.totalorder %s209, %s211
      %p218 = scmp.eq.s32.totalorder %s33, 2
      %p219 = por %p217, %p218
      %p220 = scmp.ne.s32.totalorder %s211, %s212
      %p221 = scmp.eq.s32.totalorder %s33, 0
      %p222 = por %p220, %p221
      %p223 = scmp.ne.s32.totalorder %s211, %s212
      %p224 = scmp.eq.s32.totalorder %s34, 2
      %p225 = por %p223, %p224
      %p227 = scmp.ne.s32.totalorder %s212, %s226
      %p228 = scmp.eq.s32.totalorder %s34, 0
      %p229 = por %p227, %p228
      %s231 = sadd.s32 %s230, 1
      %p234 = scmp.eq.s32.totalorder %s28, 2
      %p235 = scmp.ne.s32.totalorder %s230, %s232
      %p236 = scmp.eq.s32.totalorder %s28, 0
      %p237 = por %p235, %p236
      %p238 = scmp.ne.s32.totalorder %s230, %s232
      %p239 = scmp.eq.s32.totalorder %s33, 2
      %p240 = por %p238, %p239
      %p241 = scmp.ne.s32.totalorder %s232, %s233
      %p242 = scmp.eq.s32.totalorder %s33, 0
      %p243 = por %p241, %p242
      %p244 = scmp.ne.s32.totalorder %s232, %s233
      %p245 = scmp.eq.s32.totalorder %s34, 2
      %p246 = por %p244, %p245
      %p248 = scmp.ne.s32.totalorder %s233, %s247
      %p249 = scmp.eq.s32.totalorder %s34, 0
      %p250 = por %p248, %p249
      %s252 = sadd.s32 %s251, 1
      %p255 = scmp.eq.s32.totalorder %s28, 2
      %p256 = scmp.ne.s32.totalorder %s251, %s253
      %p257 = scmp.eq.s32.totalorder %s28, 0
      %p258 = por %p256, %p257
      %p259 = scmp.ne.s32.totalorder %s251, %s253
      %p260 = scmp.eq.s32.totalorder %s33, 2
      %p261 = por %p259, %p260
      %p262 = scmp.ne.s32.totalorder %s253, %s254
      %p263 = scmp.eq.s32.totalorder %s33, 0
      %p264 = por %p262, %p263
      %p265 = scmp.ne.s32.totalorder %s253, %s254
      %p266 = scmp.eq.s32.totalorder %s34, 2
      %p267 = por %p265, %p266
      %p269 = scmp.ne.s32.totalorder %s254, %s268
      %p270 = scmp.eq.s32.totalorder %s34, 0
      %p271 = por %p269, %p270
      %s273 = sadd.s32 %s272, 1
      %p276 = scmp.eq.s32.totalorder %s28, 2
      %p277 = scmp.ne.s32.totalorder %s272, %s274
      %p278 = scmp.eq.s32.totalorder %s28, 0
      %p279 = por %p277, %p278
      %p280 = scmp.ne.s32.totalorder %s272, %s274
      %p281 = scmp.eq.s32.totalorder %s33, 2
      %p282 = por %p280, %p281
      %p283 = scmp.ne.s32.totalorder %s274, %s275
      %p284 = scmp.eq.s32.totalorder %s33, 0
      %p285 = por %p283, %p284
      %p286 = scmp.ne.s32.totalorder %s274, %s275
      %p287 = scmp.eq.s32.totalorder %s34, 2
      %p288 = por %p286, %p287
      %p290 = scmp.ne.s32.totalorder %s275, %s289
      %p291 = scmp.eq.s32.totalorder %s34, 0
      %p292 = por %p290, %p291
      %s294 = sadd.s32 %s293, 1
      %p297 = scmp.eq.s32.totalorder %s28, 2
      %p298 = scmp.ne.s32.totalorder %s293, %s295
      %p299 = scmp.eq.s32.totalorder %s28, 0
      %p300 = por %p298, %p299
      %p301 = scmp.ne.s32.totalorder %s293, %s295
      %p302 = scmp.eq.s32.totalorder %s33, 2
      %p303 = por %p301, %p302
      %p304 = scmp.ne.s32.totalorder %s295, %s296
      %p305 = scmp.eq.s32.totalorder %s33, 0
      %p306 = por %p304, %p305
      %p307 = scmp.ne.s32.totalorder %s295, %s296
      %p308 = scmp.eq.s32.totalorder %s34, 2
      %p309 = por %p307, %p308
      %p311 = scmp.ne.s32.totalorder %s296, %s310
      %p312 = scmp.eq.s32.totalorder %s34, 0
      %p313 = por %p311, %p312
      %s315 = sadd.s32 %s314, 1
      %p318 = scmp.eq.s32.totalorder %s28, 2
      %p319 = scmp.ne.s32.totalorder %s314, %s316
      %p320 = scmp.eq.s32.totalorder %s28, 0
      %p321 = por %p319, %p320
      %p322 = scmp.ne.s32.totalorder %s314, %s316
      %p323 = scmp.eq.s32.totalorder %s33, 2
      %p324 = por %p322, %p323
      %p325 = scmp.ne.s32.totalorder %s316, %s317
      %p326 = scmp.eq.s32.totalorder %s33, 0
      %p327 = por %p325, %p326
      %p328 = scmp.ne.s32.totalorder %s316, %s317
      %p329 = scmp.eq.s32.totalorder %s34, 2
      %p330 = por %p328, %p329
      %p332 = scmp.ne.s32.totalorder %s317, %s331
      %p333 = scmp.eq.s32.totalorder %s34, 0
      %p334 = por %p332, %p333
      %s336 = sadd.s32 %s335, 1
      %p339 = scmp.eq.s32.totalorder %s28, 2
      %p340 = scmp.ne.s32.totalorder %s335, %s337
      %p341 = scmp.eq.s32.totalorder %s28, 0
      %p342 = por %p340, %p341
      %p343 = scmp.ne.s32.totalorder %s335, %s337
      %p344 = scmp.eq.s32.totalorder %s33, 2
      %p345 = por %p343, %p344
      %p346 = scmp.ne.s32.totalorder %s337, %s338
      %p347 = scmp.eq.s32.totalorder %s33, 0
      %p348 = por %p346, %p347
      %p349 = scmp.ne.s32.totalorder %s337, %s338
      %p350 = scmp.eq.s32.totalorder %s34, 2
      %p351 = por %p349, %p350
      %p353 = scmp.ne.s32.totalorder %s338, %s352
      %p354 = scmp.eq.s32.totalorder %s34, 0
      %p355 = por %p353, %p354
      %s357 = sadd.s32 %s356, 1
      %p360 = scmp.eq.s32.totalorder %s28, 2
      %p361 = scmp.ne.s32.totalorder %s356, %s358
      %p362 = scmp.eq.s32.totalorder %s28, 0
      %p363 = por %p361, %p362
      %p364 = scmp.ne.s32.totalorder %s356, %s358
      %p365 = scmp.eq.s32.totalorder %s33, 2
      %p366 = por %p364, %p365
      %p367 = scmp.ne.s32.totalorder %s358, %s359
      %p368 = scmp.eq.s32.totalorder %s33, 0
      %p369 = por %p367, %p368
      %p370 = scmp.ne.s32.totalorder %s358, %s359
      %p371 = scmp.eq.s32.totalorder %s34, 2
      %p372 = por %p370, %p371
      %p374 = scmp.ne.s32.totalorder %s359, %s373
      %p375 = scmp.eq.s32.totalorder %s34, 0
      %p376 = por %p374, %p375
      %s378 = sadd.s32 %s377, 1
      %p381 = scmp.eq.s32.totalorder %s28, 2
      %p382 = scmp.ne.s32.totalorder %s377, %s379
      %p383 = scmp.eq.s32.totalorder %s28, 0
      %p384 = por %p382, %p383
      %p385 = scmp.ne.s32.totalorder %s377, %s379
      %p386 = scmp.eq.s32.totalorder %s33, 2
      %p387 = por %p385, %p386
      %p388 = scmp.ne.s32.totalorder %s379, %s380
      %p389 = scmp.eq.s32.totalorder %s33, 0
      %p390 = por %p388, %p389
      %p391 = scmp.ne.s32.totalorder %s379, %s380
      %p392 = scmp.eq.s32.totalorder %s34, 2
      %p393 = por %p391, %p392
      %p395 = scmp.ne.s32.totalorder %s380, %s394
      %p396 = scmp.eq.s32.totalorder %s34, 0
      %p397 = por %p395, %p396
      %s399 = sadd.s32 %s398, 1
      %p402 = scmp.eq.s32.totalorder %s28, 2
      %p403 = scmp.ne.s32.totalorder %s398, %s400
      %p404 = scmp.eq.s32.totalorder %s28, 0
      %p405 = por %p403, %p404
      %p406 = scmp.ne.s32.totalorder %s398, %s400
      %p407 = scmp.eq.s32.totalorder %s33, 2
      %p408 = por %p406, %p407
      %p409 = scmp.ne.s32.totalorder %s400, %s401
      %p410 = scmp.eq.s32.totalorder %s33, 0
      %p411 = por %p409, %p410
      %p412 = scmp.ne.s32.totalorder %s400, %s401
      %p413 = scmp.eq.s32.totalorder %s34, 2
      %p414 = por %p412, %p413
      %p416 = scmp.ne.s32.totalorder %s401, %s415
      %p417 = scmp.eq.s32.totalorder %s34, 0
      %p418 = por %p416, %p417
      %s420 = sadd.s32 %s419, 1
      %p423 = scmp.eq.s32.totalorder %s28, 2
      %p424 = scmp.ne.s32.totalorder %s419, %s421
      %p425 = scmp.eq.s32.totalorder %s28, 0
      %p426 = por %p424, %p425
      %p427 = scmp.ne.s32.totalorder %s419, %s421
      %p428 = scmp.eq.s32.totalorder %s33, 2
      %p429 = por %p427, %p428
      %p430 = scmp.ne.s32.totalorder %s421, %s422
      %p431 = scmp.eq.s32.totalorder %s33, 0
      %p432 = por %p430, %p431
      %p433 = scmp.ne.s32.totalorder %s421, %s422
      %p434 = scmp.eq.s32.totalorder %s34, 2
      %p435 = por %p433, %p434
      %p437 = scmp.ne.s32.totalorder %s422, %s436
      %p438 = scmp.eq.s32.totalorder %s34, 0
      %p439 = por %p437, %p438
      %s440 = ssub.s32 %s28, %s35
      %p441 = scmp.eq.s32.totalorder %s440, 0
      %s443 = sadd.s32 %s442, 1
      %s444 = scalar_select %p441, %s442, %s443
      %p447 = pneg %p441
      %p448 = scmp.eq.s32.totalorder %s28, 2
      %p449 = por %p447, %p448
      %p450 = scmp.ne.s32.totalorder %s442, %s445
      %p451 = scmp.eq.s32.totalorder %s28, 0
      %p452 = por %p450, %p451
      %p453 = scmp.ne.s32.totalorder %s442, %s445
      %p454 = scmp.eq.s32.totalorder %s33, 2
      %p455 = por %p453, %p454
      %p456 = scmp.ne.s32.totalorder %s445, %s446
      %p457 = scmp.eq.s32.totalorder %s33, 0
      %p458 = por %p456, %p457
      %p459 = scmp.ne.s32.totalorder %s445, %s446
      %p460 = scmp.eq.s32.totalorder %s34, 2
      %p461 = por %p459, %p460
      %p463 = scmp.ne.s32.totalorder %s446, %s462
      %p464 = scmp.eq.s32.totalorder %s34, 0
      %p465 = por %p463, %p464
      %p466 = scmp.le.s32.totalorder 1, %s28
      %p467 = scmp.lt.s32.totalorder %s28, 4
      %p468 = pnand %p466, %p467
      %p469 = pneg %p468
      // Predicated region
      $region9: #{tpu_custom_call.1} parent=5 // pred_check
        _
      $region10: #{tpu_custom_call.1} parent=5 // pred_check_branch
        %471 = sbr.rel (%p468) target = $region12
      $region11: #{tpu_custom_call.1} parent=5 // pred_region
        %s472 = ssub.s32 %s28, 1
        // Predicated region
        $region13: #{tpu_custom_call.1} parent=11 // pred_check
          %p473 = pneg %p75
        $region14: #{tpu_custom_call.1} parent=11 // pred_check_branch
          %475 = sbr.rel (%p473) target = $region16
        $region15: #{tpu_custom_call.1} parent=11 // pred_region
          _
        $region16: #{tpu_custom_call.1} parent=11 // pred_fallthru
          _
        // Predicated region
        $region17: #{tpu_custom_call.1} parent=11 // pred_check
          %p476 = pneg %p96
        $region18: #{tpu_custom_call.1} parent=11 // pred_check_branch
          %478 = sbr.rel (%p476) target = $region20
        $region19: #{tpu_custom_call.1} parent=11 // pred_region
          _
        $region20: #{tpu_custom_call.1} parent=11 // pred_fallthru
          _
        // Predicated region
        $region21: #{tpu_custom_call.1} parent=11 // pred_check
          %p479 = pneg %p117
        $region22: #{tpu_custom_call.1} parent=11 // pred_check_branch
          %481 = sbr.rel (%p479) target = $region24
        $region23: #{tpu_custom_call.1} parent=11 // pred_region
          _
        $region24: #{tpu_custom_call.1} parent=11 // pred_fallthru
          _
        // Predicated region
        $region25: #{tpu_custom_call.1} parent=11 // pred_check
          %p482 = pneg %p138
        $region26: #{tpu_custom_call.1} parent=11 // pred_check_branch
          %484 = sbr.rel (%p482) target = $region28
        $region27: #{tpu_custom_call.1} parent=11 // pred_region
          _
        $region28: #{tpu_custom_call.1} parent=11 // pred_fallthru
          _
        // Predicated region
        $region29: #{tpu_custom_call.1} parent=11 // pred_check
          %p485 = pneg %p159
        $region30: #{tpu_custom_call.1} parent=11 // pred_check_branch
          %487 = sbr.rel (%p485) target = $region32
        $region31: #{tpu_custom_call.1} parent=11 // pred_region
          _
        $region32: #{tpu_custom_call.1} parent=11 // pred_fallthru
          _
        // Predicated region
        $region33: #{tpu_custom_call.1} parent=11 // pred_check
          %p488 = pneg %p180
        $region34: #{tpu_custom_call.1} parent=11 // pred_check_branch
          %490 = sbr.rel (%p488) target = $region36
        $region35: #{tpu_custom_call.1} parent=11 // pred_region
          _
        $region36: #{tpu_custom_call.1} parent=11 // pred_fallthru
          _
        // Predicated region
        $region37: #{tpu_custom_call.1} parent=11 // pred_check
          %p491 = pneg %p201
        $region38: #{tpu_custom_call.1} parent=11 // pred_check_branch
          %493 = sbr.rel (%p491) target = $region40
        $region39: #{tpu_custom_call.1} parent=11 // pred_region
          _
        $region40: #{tpu_custom_call.1} parent=11 // pred_fallthru
          _
        // Predicated region
        $region41: #{tpu_custom_call.1} parent=11 // pred_check
          %p494 = pneg %p222
        $region42: #{tpu_custom_call.1} parent=11 // pred_check_branch
          %496 = sbr.rel (%p494) target = $region44
        $region43: #{tpu_custom_call.1} parent=11 // pred_region
          _
        $region44: #{tpu_custom_call.1} parent=11 // pred_fallthru
          _
        // Predicated region
        $region45: #{tpu_custom_call.1} parent=11 // pred_check
          %p497 = pneg %p243
        $region46: #{tpu_custom_call.1} parent=11 // pred_check_branch
          %499 = sbr.rel (%p497) target = $region48
        $region47: #{tpu_custom_call.1} parent=11 // pred_region
          _
        $region48: #{tpu_custom_call.1} parent=11 // pred_fallthru
          _
        // Predicated region
        $region49: #{tpu_custom_call.1} parent=11 // pred_check
          %p500 = pneg %p264
        $region50: #{tpu_custom_call.1} parent=11 // pred_check_branch
          %502 = sbr.rel (%p500) target = $region52
        $region51: #{tpu_custom_call.1} parent=11 // pred_region
          _
        $region52: #{tpu_custom_call.1} parent=11 // pred_fallthru
          _
        // Predicated region
        $region53: #{tpu_custom_call.1} parent=11 // pred_check
          %p503 = pneg %p285
        $region54: #{tpu_custom_call.1} parent=11 // pred_check_branch
          %505 = sbr.rel (%p503) target = $region56
        $region55: #{tpu_custom_call.1} parent=11 // pred_region
          _
        $region56: #{tpu_custom_call.1} parent=11 // pred_fallthru
          _
        // Predicated region
        $region57: #{tpu_custom_call.1} parent=11 // pred_check
          %p506 = pneg %p306
        $region58: #{tpu_custom_call.1} parent=11 // pred_check_branch
          %508 = sbr.rel (%p506) target = $region60
        $region59: #{tpu_custom_call.1} parent=11 // pred_region
          _
        $region60: #{tpu_custom_call.1} parent=11 // pred_fallthru
          _
        // Predicated region
        $region61: #{tpu_custom_call.1} parent=11 // pred_check
          %p509 = pneg %p327
        $region62: #{tpu_custom_call.1} parent=11 // pred_check_branch
          %511 = sbr.rel (%p509) target = $region64
        $region63: #{tpu_custom_call.1} parent=11 // pred_region
          _
        $region64: #{tpu_custom_call.1} parent=11 // pred_fallthru
          _
        // Predicated region
        $region65: #{tpu_custom_call.1} parent=11 // pred_check
          %p512 = pneg %p348
        $region66: #{tpu_custom_call.1} parent=11 // pred_check_branch
          %514 = sbr.rel (%p512) target = $region68
        $region67: #{tpu_custom_call.1} parent=11 // pred_region
          _
        $region68: #{tpu_custom_call.1} parent=11 // pred_fallthru
          _
        // Predicated region
        $region69: #{tpu_custom_call.1} parent=11 // pred_check
          %p515 = pneg %p369
        $region70: #{tpu_custom_call.1} parent=11 // pred_check_branch
          %517 = sbr.rel (%p515) target = $region72
        $region71: #{tpu_custom_call.1} parent=11 // pred_region
          _
        $region72: #{tpu_custom_call.1} parent=11 // pred_fallthru
          _
        // Predicated region
        $region73: #{tpu_custom_call.1} parent=11 // pred_check
          %p518 = pneg %p390
        $region74: #{tpu_custom_call.1} parent=11 // pred_check_branch
          %520 = sbr.rel (%p518) target = $region76
        $region75: #{tpu_custom_call.1} parent=11 // pred_region
          _
        $region76: #{tpu_custom_call.1} parent=11 // pred_fallthru
          _
        // Predicated region
        $region77: #{tpu_custom_call.1} parent=11 // pred_check
          %p521 = pneg %p411
        $region78: #{tpu_custom_call.1} parent=11 // pred_check_branch
          %523 = sbr.rel (%p521) target = $region80
        $region79: #{tpu_custom_call.1} parent=11 // pred_region
          _
        $region80: #{tpu_custom_call.1} parent=11 // pred_fallthru
          _
        // Predicated region
        $region81: #{tpu_custom_call.1} parent=11 // pred_check
          %p524 = pneg %p432
        $region82: #{tpu_custom_call.1} parent=11 // pred_check_branch
          %526 = sbr.rel (%p524) target = $region84
        $region83: #{tpu_custom_call.1} parent=11 // pred_region
          _
        $region84: #{tpu_custom_call.1} parent=11 // pred_fallthru
          _
      $region12: #{tpu_custom_call.1} parent=5 // pred_fallthru
        _
      %p527 = scmp.lt.s32.totalorder %s28, 3
      // Predicated region
      $region85: #{tpu_custom_call.1} parent=5 // pred_check
        %p528 = pneg %p527
      $region86: #{tpu_custom_call.1} parent=5 // pred_check_branch
        %530 = sbr.rel (%p528) target = $region88
      $region87: #{tpu_custom_call.1} parent=5 // pred_region
        // Predicated region
        $region89: #{tpu_custom_call.1} parent=87 // pred_check
          %p531 = pneg %p48
        $region90: #{tpu_custom_call.1} parent=87 // pred_check_branch
          %533 = sbr.rel (%p531) target = $region92
        $region91: #{tpu_custom_call.1} parent=87 // pred_region
          %p534 = scmp.lt.s32.totalorder %s28, 2
          %s535 = scalar_select %p534, %s28, 2
          %s536 = smul.addr %s535, 4
          %s537 = smul.addr %s536, 8
          %s538 = scalar_lea.vmem %s0, %s537
        $region92: #{tpu_custom_call.1} parent=87 // pred_fallthru
          _
      $region88: #{tpu_custom_call.1} parent=5 // pred_fallthru
        _
      %p539 = scmp.le.s32.totalorder 1, %s28
      %p540 = scmp.lt.s32.totalorder %s28, 4
      %p541 = pnand %p539, %p540
      %p542 = pneg %p541
      // Predicated region
      $region93: #{tpu_custom_call.1} parent=5 // pred_check
        _
      $region94: #{tpu_custom_call.1} parent=5 // pred_check_branch
        %544 = sbr.rel (%p541) target = $region96
      $region95: #{tpu_custom_call.1} parent=5 // pred_region
        %s545 = ssub.s32 %s28, 1
        %p546 = scmp.lt.s32.totalorder %s33, 2
        %s547 = scalar_select %p546, %s33, 2
        %s548 = smul.addr %s547, 4
        %s549 = smul.addr %s548, 8
        %s550 = scalar_lea.vmem %s0, %s549
        %p551 = pneg %p54
        %p552 = pneg %p51
        %p553 = pneg %p75
        %p554 = pneg %p72
        %p555 = pneg %p96
        %p556 = pneg %p93
        %p557 = pneg %p117
        %p558 = pneg %p114
        %p559 = pneg %p138
        %p560 = pneg %p135
        %p561 = pneg %p159
        %p562 = pneg %p156
        %p563 = pneg %p180
        %p564 = pneg %p177
        %p565 = pneg %p201
        %p566 = pneg %p198
        %p567 = pneg %p222
        %p568 = pneg %p219
        %p569 = pneg %p243
        %p570 = pneg %p240
        %p571 = pneg %p264
        %p572 = pneg %p261
        %p573 = pneg %p285
        %p574 = pneg %p282
        %p575 = pneg %p306
        %p576 = pneg %p303
        %p577 = pneg %p327
        %p578 = pneg %p324
        %p579 = pneg %p348
        %p580 = pneg %p345
        %p581 = pneg %p369
        %p582 = pneg %p366
        %p583 = pneg %p390
        %p584 = pneg %p387
        %p585 = pneg %p411
        %p586 = pneg %p408
        %p587 = pneg %p432
        %p588 = pneg %p429
        %p589 = pneg %p458
        %p590 = pneg %p455
        %s591 = sand.u32 %s445, 1
        %s592 = scalar_lea.sflag [#allocation3], %s591
        %s593 = sand.u32 %s445, 1
        %s594 = smul.addr %s593, 8
        %s595 = scalar_lea.vmem [#allocation2], %s594
        %p596 = scmp.lt.s32.totalorder %s33, 2
        %s597 = scalar_select %p596, %s33, 2
        %s598 = smul.addr %s597, 4
        %s599 = smul.addr %s598, 8
        %s600 = scalar_lea.vmem %s0, %s599
        %v601 = vld [vmem:[%s600] sm:$0xff]
        %v602 = vld [vmem:[%s600 + $0x8] sm:$0xff]
        %v603 = vld [vmem:[%s600 + $0x10] sm:$0xff]
        %v604 = vld [vmem:[%s600 + $0x18] sm:$0xff]
        %v605 = vld [vmem:[%s1] sm:$0xff]
        %v606 = vld [vmem:[%s1 + $0x8] sm:$0xff]
        %v607 = vld [vmem:[%s1 + $0x10] sm:$0xff]
        %v608 = vld [vmem:[%s1 + $0x18] sm:$0xff]
        %v609 = vld [vmem:[%s1 + $0x20] sm:$0xff]
        %v610 = vld [vmem:[%s1 + $0x28] sm:$0xff]
        %v611 = vld [vmem:[%s1 + $0x30] sm:$0xff]
        %v612 = vld [vmem:[%s1 + $0x38] sm:$0xff]
        %v613 = vld [vmem:[%s1 + $0x40] sm:$0xff]
        %v614 = vld [vmem:[%s1 + $0x48] sm:$0xff]
        %v615 = vld [vmem:[%s1 + $0x50] sm:$0xff]
        %v616 = vld [vmem:[%s1 + $0x58] sm:$0xff]
        %v617 = vld [vmem:[%s1 + $0x60] sm:$0xff]
        %v618 = vld [vmem:[%s1 + $0x68] sm:$0xff]
        %v619 = vld [vmem:[%s1 + $0x70] sm:$0xff]
        %v620 = vld [vmem:[%s1 + $0x78] sm:$0xff]
        %v621 = vld [vmem:[%s1 + $0x80] sm:$0xff]
        %v622 = vld [vmem:[%s1 + $0x88] sm:$0xff]
        %v623 = vld [vmem:[%s1 + $0x90] sm:$0xff]
        %v624 = vld [vmem:[%s1 + $0x98] sm:$0xff]
        %v625 = vld [vmem:[%s1 + $0xa0] sm:$0xff]
        %v626 = vld [vmem:[%s1 + $0xa8] sm:$0xff]
        %v627 = vld [vmem:[%s1 + $0xb0] sm:$0xff]
        %v628 = vld [vmem:[%s1 + $0xb8] sm:$0xff]
        %v629 = vld [vmem:[%s1 + $0xc0] sm:$0xff]
        %v630 = vld [vmem:[%s1 + $0xc8] sm:$0xff]
        %v631 = vld [vmem:[%s1 + $0xd0] sm:$0xff]
        %v632 = vld [vmem:[%s1 + $0xd8] sm:$0xff]
        %v633 = vld [vmem:[%s1 + $0xe0] sm:$0xff]
        %v634 = vld [vmem:[%s1 + $0xe8] sm:$0xff]
        %v635 = vld [vmem:[%s1 + $0xf0] sm:$0xff]
        %v636 = vld [vmem:[%s1 + $0xf8] sm:$0xff]
        %v637 = vld [vmem:[%s1 + $0x100] sm:$0xff]
        %v638 = vld [vmem:[%s1 + $0x108] sm:$0xff]
        %v639 = vld [vmem:[%s1 + $0x110] sm:$0xff]
        %v640 = vld [vmem:[%s1 + $0x118] sm:$0xff]
        %v641 = vld [vmem:[%s1 + $0x120] sm:$0xff]
        %v642 = vld [vmem:[%s1 + $0x128] sm:$0xff]
        %v643 = vld [vmem:[%s1 + $0x130] sm:$0xff]
        %v644 = vld [vmem:[%s1 + $0x138] sm:$0xff]
        %v645 = vld [vmem:[%s1 + $0x140] sm:$0xff]
        %v646 = vld [vmem:[%s1 + $0x148] sm:$0xff]
        %v647 = vld [vmem:[%s1 + $0x150] sm:$0xff]
        %v648 = vld [vmem:[%s1 + $0x158] sm:$0xff]
        %v649 = vld [vmem:[%s1 + $0x160] sm:$0xff]
        %v650 = vld [vmem:[%s1 + $0x168] sm:$0xff]
        %v651 = vld [vmem:[%s1 + $0x170] sm:$0xff]
        %v652 = vld [vmem:[%s1 + $0x178] sm:$0xff]
        %v653 = vld [vmem:[%s1 + $0x180] sm:$0xff]
        %v654 = vld [vmem:[%s1 + $0x188] sm:$0xff]
        %v655 = vld [vmem:[%s1 + $0x190] sm:$0xff]
        %v656 = vld [vmem:[%s1 + $0x198] sm:$0xff]
        %v657 = vld [vmem:[%s1 + $0x1a0] sm:$0xff]
        %v658 = vld [vmem:[%s1 + $0x1a8] sm:$0xff]
        %v659 = vld [vmem:[%s1 + $0x1b0] sm:$0xff]
        %v660 = vld [vmem:[%s1 + $0x1b8] sm:$0xff]
        %v661 = vld [vmem:[%s1 + $0x1c0] sm:$0xff]
        %v662 = vld [vmem:[%s1 + $0x1c8] sm:$0xff]
        %v663 = vld [vmem:[%s1 + $0x1d0] sm:$0xff]
        %v664 = vld [vmem:[%s1 + $0x1d8] sm:$0xff]
        %v665 = vld [vmem:[%s1 + $0x1e0] sm:$0xff]
        %v666 = vld [vmem:[%s1 + $0x1e8] sm:$0xff]
        %v667 = vld [vmem:[%s1 + $0x1f0] sm:$0xff]
        %v668 = vld [vmem:[%s1 + $0x1f8] sm:$0xff]
        %v669 = vld [vmem:[%s2] sm:$0x1]
        %v671 = vlaneseq
        %v672 = vshrl.u32 %v671, 7
        %v673 = vsub.s32 0, %v672
        %v674 = vrot.slane %v669, %v673
        %676 = vmatprep.subr.mxu0 0.0
        %677 = vmatpush1.msra.mxu0 %v605
        %678 = vmatprep.subr.mxu0 0.0
        %679 = vmatpush1.msra.mxu0 %v606
        %680 = vmatprep.subr.mxu0 0.0
        %681 = vmatpush1.msra.mxu0 %v607
        %682 = vmatprep.subr.mxu0 0.0
        %683 = vmatpush1.msra.mxu0 %v608
        %684 = vmatprep.subr.mxu0 0.0
        %685 = vmatpush1.msra.mxu0 %v609
        %686 = vmatprep.subr.mxu0 0.0
        %687 = vmatpush1.msra.mxu0 %v610
        %688 = vmatprep.subr.mxu0 0.0
        %689 = vmatpush1.msra.mxu0 %v611
        %690 = vmatprep.subr.mxu0 0.0
        %691 = vmatpush1.msra.mxu0 %v612
        %692 = vmatprep.subr.mxu0 0.0
        %693 = vmatpush1.msra.mxu0 %v613
        %694 = vmatprep.subr.mxu0 0.0
        %695 = vmatpush1.msra.mxu0 %v614
        %696 = vmatprep.subr.mxu0 0.0
        %697 = vmatpush1.msra.mxu0 %v615
        %698 = vmatprep.subr.mxu0 0.0
        %699 = vmatpush1.msra.mxu0 %v616
        %700 = vmatprep.subr.mxu0 0.0
        %701 = vmatpush1.msra.mxu0 %v617
        %702 = vmatprep.subr.mxu0 0.0
        %703 = vmatpush1.msra.mxu0 %v618
        %704 = vmatprep.subr.mxu0 0.0
        %705 = vmatpush1.msra.mxu0 %v619
        %706 = vmatprep.subr.mxu0 0.0
        %707 = vmatpush1.msra.mxu0 %v620
        %708 = vmatprep.subr.mxu0 0.0
        %709 = vmatpush1.msra.mxu0 %v621
        %710 = vmatprep.subr.mxu0 0.0
        %711 = vmatpush1.msra.mxu0 %v622
        %712 = vmatprep.subr.mxu0 0.0
        %713 = vmatpush1.msra.mxu0 %v623
        %714 = vmatprep.subr.mxu0 0.0
        %715 = vmatpush1.msra.mxu0 %v624
        %716 = vmatprep.subr.mxu0 0.0
        %717 = vmatpush1.msra.mxu0 %v625
        %718 = vmatprep.subr.mxu0 0.0
        %719 = vmatpush1.msra.mxu0 %v626
        %720 = vmatprep.subr.mxu0 0.0
        %721 = vmatpush1.msra.mxu0 %v627
        %722 = vmatprep.subr.mxu0 0.0
        %723 = vmatpush1.msra.mxu0 %v628
        %724 = vmatprep.subr.mxu0 0.0
        %725 = vmatpush1.msra.mxu0 %v629
        %726 = vmatprep.subr.mxu0 0.0
        %727 = vmatpush1.msra.mxu0 %v630
        %728 = vmatprep.subr.mxu0 0.0
        %729 = vmatpush1.msra.mxu0 %v631
        %730 = vmatprep.subr.mxu0 0.0
        %731 = vmatpush1.msra.mxu0 %v632
        %732 = vmatprep.subr.mxu0 0.0
        %733 = vmatpush1.msra.mxu0 %v633
        %734 = vmatprep.subr.mxu0 0.0
        %735 = vmatpush1.msra.mxu0 %v634
        %736 = vmatprep.subr.mxu0 0.0
        %737 = vmatpush1.msra.mxu0 %v635
        %738 = vmatprep.subr.mxu0 0.0
        %739 = vmatpush1.msra.mxu0 %v636
        %740 = vmatprep.mubr.f32.mxu0 %v602
        %741 = vmatmul.mubr.f32.gmra.mrb[0].mxu0 %v601
        %v742 = vpop.f32.mrb[0].mxu0
        %v743 = vadd.f32 %v674, %v742
        %v744 = vpop.f32.mrb[0].mxu0
        %745 = vdwg.mxu0
        %746 = vmatprep.subr.mxu0 0.0
        %747 = vmatpush1.msra.mxu0 %v637
        %748 = vmatprep.subr.mxu0 0.0
        %749 = vmatpush1.msra.mxu0 %v638
        %750 = vmatprep.subr.mxu0 0.0
        %751 = vmatpush1.msra.mxu0 %v639
        %752 = vmatprep.subr.mxu0 0.0
        %753 = vmatpush1.msra.mxu0 %v640
        %754 = vmatprep.subr.mxu0 0.0
        %755 = vmatpush1.msra.mxu0 %v641
        %756 = vmatprep.subr.mxu0 0.0
        %757 = vmatpush1.msra.mxu0 %v642
        %758 = vmatprep.subr.mxu0 0.0
        %759 = vmatpush1.msra.mxu0 %v643
        %760 = vmatprep.subr.mxu0 0.0
        %761 = vmatpush1.msra.mxu0 %v644
        %762 = vmatprep.subr.mxu0 0.0
        %763 = vmatpush1.msra.mxu0 %v645
        %764 = vmatprep.subr.mxu0 0.0
        %765 = vmatpush1.msra.mxu0 %v646
        %766 = vmatprep.subr.mxu0 0.0
        %767 = vmatpush1.msra.mxu0 %v647
        %768 = vmatprep.subr.mxu0 0.0
        %769 = vmatpush1.msra.mxu0 %v648
        %770 = vmatprep.subr.mxu0 0.0
        %771 = vmatpush1.msra.mxu0 %v649
        %772 = vmatprep.subr.mxu0 0.0
        %773 = vmatpush1.msra.mxu0 %v650
        %774 = vmatprep.subr.mxu0 0.0
        %775 = vmatpush1.msra.mxu0 %v651
        %776 = vmatprep.subr.mxu0 0.0
        %777 = vmatpush1.msra.mxu0 %v652
        %778 = vmatprep.subr.mxu0 0.0
        %779 = vmatpush1.msra.mxu0 %v653
        %780 = vmatprep.subr.mxu0 0.0
        %781 = vmatpush1.msra.mxu0 %v654
        %782 = vmatprep.subr.mxu0 0.0
        %783 = vmatpush1.msra.mxu0 %v655
        %784 = vmatprep.subr.mxu0 0.0
        %785 = vmatpush1.msra.mxu0 %v656
        %786 = vmatprep.subr.mxu0 0.0
        %787 = vmatpush1.msra.mxu0 %v657
        %788 = vmatprep.subr.mxu0 0.0
        %789 = vmatpush1.msra.mxu0 %v658
        %790 = vmatprep.subr.mxu0 0.0
        %791 = vmatpush1.msra.mxu0 %v659
        %792 = vmatprep.subr.mxu0 0.0
        %793 = vmatpush1.msra.mxu0 %v660
        %794 = vmatprep.subr.mxu0 0.0
        %795 = vmatpush1.msra.mxu0 %v661
        %796 = vmatprep.subr.mxu0 0.0
        %797 = vmatpush1.msra.mxu0 %v662
        %798 = vmatprep.subr.mxu0 0.0
        %799 = vmatpush1.msra.mxu0 %v663
        %800 = vmatprep.subr.mxu0 0.0
        %801 = vmatpush1.msra.mxu0 %v664
        %802 = vmatprep.subr.mxu0 0.0
        %803 = vmatpush1.msra.mxu0 %v665
        %804 = vmatprep.subr.mxu0 0.0
        %805 = vmatpush1.msra.mxu0 %v666
        %806 = vmatprep.subr.mxu0 0.0
        %807 = vmatpush1.msra.mxu0 %v667
        %808 = vmatprep.subr.mxu0 0.0
        %809 = vmatpush1.msra.mxu0 %v668
        %810 = vmatprep.mubr.f32.mxu0 %v604
        %811 = vmatmul.mubr.f32.gmra.mrb[0].mxu0 %v603
        %v812 = vpop.f32.mrb[0].mxu0
        %v813 = vadd.f32 %v743, %v812
        %v814 = vpop.f32.mrb[0].mxu0
        %815 = vdwg.mxu0
        %vm816 = vcmask 261120
        %v817 = vsel %vm816, %v813, 0.0
        %818 = vadd.xlane.f32.xlu0 %v817
        %v819 = vpop.xlane.xlu0 %818
        %v820 = vrcp.pop 32.0
        %v821 = vmul.f32 %v819, %v820
        %v822 = vsub.f32 %v813, %v821
        %v823 = vmul.f32 %v822, %v822
        %v824 = vsel %vm816, %v823, 0.0
        %825 = vadd.xlane.f32.xlu0 %v824
        %v826 = vpop.xlane.xlu0 %825
        %v827 = vmul.f32 %v826, %v820
        %v828 = vld [vmem:[%s3] sm:$0x1]
        %v829 = vadd.f32 %v827, 1e-05
        %v830 = vrsqrt.pop %v829
        %v832 = vlaneseq
        %v833 = vshrl.u32 %v832, 7
        %v834 = vsub.s32 0, %v833
        %v835 = vrot.slane %v828, %v834
        %v837 = vmul.f32 %v835, %v830
        %v838 = vmul.f32 %v822, %v837
        %v839 = vld [vmem:[%s4] sm:$0x1]
        %v841 = vlaneseq
        %v842 = vshrl.u32 %v841, 7
        %v843 = vsub.s32 0, %v842
        %v844 = vrot.slane %v839, %v843
        %v846 = vadd.f32 %v838, %v844
        %v847 = vmax.f32 %v846, 0.0
        %v848 = vld [vmem:[%s5] sm:$0xff]
        %v849 = vld [vmem:[%s5 + $0x8] sm:$0xff]
        %v850 = vld [vmem:[%s5 + $0x10] sm:$0xff]
        %v851 = vld [vmem:[%s5 + $0x18] sm:$0xff]
        %v852 = vld [vmem:[%s6] sm:$0x1]
        %v854 = vlaneseq
        %v855 = vshrl.u32 %v854, 7
        %v856 = vsub.s32 0, %v855
        %v857 = vrot.slane %v852, %v856
        %v860 = vsel %vm816, %v847, 0
        %862 = vmatprep.subr.mxu0 0.0
        %863 = vmatpush1.msra.mxu0 %v848
        %864 = vmatprep.subr.mxu0 0.0
        %865 = vmatpush1.msra.mxu0 %v849
        %866 = vmatprep.subr.mxu0 0.0
        %867 = vmatpush1.msra.mxu0 %v850
        %868 = vmatprep.subr.mxu0 0.0
        %869 = vmatpush1.msra.mxu0 %v851
        %870 = vmatprep.subr.mxu0 0.0
        %871 = vmatpush1.msra.mxu0 0.0
        %872 = vmatprep.subr.mxu0 0.0
        %873 = vmatpush1.msra.mxu0 0.0
        %874 = vmatprep.subr.mxu0 0.0
        %875 = vmatpush1.msra.mxu0 0.0
        %876 = vmatprep.subr.mxu0 0.0
        %877 = vmatpush1.msra.mxu0 0.0
        %878 = vmatprep.subr.mxu0 0.0
        %879 = vmatpush1.msra.mxu0 0.0
        %880 = vmatprep.subr.mxu0 0.0
        %881 = vmatpush1.msra.mxu0 0.0
        %882 = vmatprep.subr.mxu0 0.0
        %883 = vmatpush1.msra.mxu0 0.0
        %884 = vmatprep.subr.mxu0 0.0
        %885 = vmatpush1.msra.mxu0 0.0
        %886 = vmatprep.subr.mxu0 0.0
        %887 = vmatpush1.msra.mxu0 0.0
        %888 = vmatprep.subr.mxu0 0.0
        %889 = vmatpush1.msra.mxu0 0.0
        %890 = vmatprep.subr.mxu0 0.0
        %891 = vmatpush1.msra.mxu0 0.0
        %892 = vmatprep.subr.mxu0 0.0
        %893 = vmatpush1.msra.mxu0 0.0
        %894 = vmatprep.subr.mxu0 0.0
        %895 = vmatpush1.msra.mxu0 0.0
        %896 = vmatprep.subr.mxu0 0.0
        %897 = vmatpush1.msra.mxu0 0.0
        %898 = vmatprep.subr.mxu0 0.0
        %899 = vmatpush1.msra.mxu0 0.0
        %900 = vmatprep.subr.mxu0 0.0
        %901 = vmatpush1.msra.mxu0 0.0
        %902 = vmatprep.subr.mxu0 0.0
        %903 = vmatpush1.msra.mxu0 0.0
        %904 = vmatprep.subr.mxu0 0.0
        %905 = vmatpush1.msra.mxu0 0.0
        %906 = vmatprep.subr.mxu0 0.0
        %907 = vmatpush1.msra.mxu0 0.0
        %908 = vmatprep.subr.mxu0 0.0
        %909 = vmatpush1.msra.mxu0 0.0
        %910 = vmatprep.subr.mxu0 0.0
        %911 = vmatpush1.msra.mxu0 0.0
        %912 = vmatprep.subr.mxu0 0.0
        %913 = vmatpush1.msra.mxu0 0.0
        %914 = vmatprep.subr.mxu0 0.0
        %915 = vmatpush1.msra.mxu0 0.0
        %916 = vmatprep.subr.mxu0 0.0
        %917 = vmatpush1.msra.mxu0 0.0
        %918 = vmatprep.subr.mxu0 0.0
        %919 = vmatpush1.msra.mxu0 0.0
        %920 = vmatprep.subr.mxu0 0.0
        %921 = vmatpush1.msra.mxu0 0.0
        %922 = vmatprep.subr.mxu0 0.0
        %923 = vmatpush1.msra.mxu0 0.0
        %924 = vmatprep.subr.mxu0 0.0
        %925 = vmatpush1.msra.mxu0 0.0
        %926 = vmatprep.mubr.f32.mxu0 0.0
        %927 = vmatmul.mubr.f32.gmra.mrb[0].mxu0 %v860
        %v928 = vpop.f32.mrb[0].mxu0
        %v929 = vadd.f32 %v857, %v928
        %v930 = vpop.f32.mrb[0].mxu0
        %931 = vdwg.mxu0
        %v932 = vsel %vm816, %v929, 0.0
        %933 = vadd.xlane.f32.xlu0 %v932
        %v934 = vpop.xlane.xlu0 %933
        %v935 = vmul.f32 %v934, %v820
        %v936 = vsub.f32 %v929, %v935
        %v937 = vmul.f32 %v936, %v936
        %v938 = vsel %vm816, %v937, 0.0
        %939 = vadd.xlane.f32.xlu0 %v938
        %v940 = vpop.xlane.xlu0 %939
        %v941 = vmul.f32 %v940, %v820
        %v942 = vld [vmem:[%s7] sm:$0x1]
        %v943 = vadd.f32 %v941, 1e-05
        %v944 = vrsqrt.pop %v943
        %v946 = vlaneseq
        %v947 = vshrl.u32 %v946, 7
        %v948 = vsub.s32 0, %v947
        %v949 = vrot.slane %v942, %v948
        %v951 = vmul.f32 %v949, %v944
        %v952 = vmul.f32 %v936, %v951
        %v953 = vld [vmem:[%s8] sm:$0x1]
        %v955 = vlaneseq
        %v956 = vshrl.u32 %v955, 7
        %v957 = vsub.s32 0, %v956
        %v958 = vrot.slane %v953, %v957
        %v960 = vadd.f32 %v952, %v958
        %v961 = vmax.f32 %v960, 0.0
        %v962 = vld [vmem:[%s9] sm:$0xff]
        %v963 = vld [vmem:[%s9 + $0x8] sm:$0xff]
        %v964 = vld [vmem:[%s9 + $0x10] sm:$0xff]
        %v965 = vld [vmem:[%s9 + $0x18] sm:$0xff]
        %v966 = vld [vmem:[%s10] sm:$0x1]
        %v968 = vlaneseq
        %v969 = vshrl.u32 %v968, 7
        %v970 = vsub.s32 0, %v969
        %v971 = vrot.slane %v966, %v970
        %v974 = vsel %vm816, %v961, 0
        %976 = vmatprep.subr.mxu0 0.0
        %977 = vmatpush1.msra.mxu0 %v962
        %978 = vmatprep.subr.mxu0 0.0
        %979 = vmatpush1.msra.mxu0 %v963
        %980 = vmatprep.subr.mxu0 0.0
        %981 = vmatpush1.msra.mxu0 %v964
        %982 = vmatprep.subr.mxu0 0.0
        %983 = vmatpush1.msra.mxu0 %v965
        %984 = vmatprep.subr.mxu0 0.0
        %985 = vmatpush1.msra.mxu0 0.0
        %986 = vmatprep.subr.mxu0 0.0
        %987 = vmatpush1.msra.mxu0 0.0
        %988 = vmatprep.subr.mxu0 0.0
        %989 = vmatpush1.msra.mxu0 0.0
        %990 = vmatprep.subr.mxu0 0.0
        %991 = vmatpush1.msra.mxu0 0.0
        %992 = vmatprep.subr.mxu0 0.0
        %993 = vmatpush1.msra.mxu0 0.0
        %994 = vmatprep.subr.mxu0 0.0
        %995 = vmatpush1.msra.mxu0 0.0
        %996 = vmatprep.subr.mxu0 0.0
        %997 = vmatpush1.msra.mxu0 0.0
        %998 = vmatprep.subr.mxu0 0.0
        %999 = vmatpush1.msra.mxu0 0.0
        %1000 = vmatprep.subr.mxu0 0.0
        %1001 = vmatpush1.msra.mxu0 0.0
        %1002 = vmatprep.subr.mxu0 0.0
        %1003 = vmatpush1.msra.mxu0 0.0
        %1004 = vmatprep.subr.mxu0 0.0
        %1005 = vmatpush1.msra.mxu0 0.0
        %1006 = vmatprep.subr.mxu0 0.0
        %1007 = vmatpush1.msra.mxu0 0.0
        %1008 = vmatprep.subr.mxu0 0.0
        %1009 = vmatpush1.msra.mxu0 0.0
        %1010 = vmatprep.subr.mxu0 0.0
        %1011 = vmatpush1.msra.mxu0 0.0
        %1012 = vmatprep.subr.mxu0 0.0
        %1013 = vmatpush1.msra.mxu0 0.0
        %1014 = vmatprep.subr.mxu0 0.0
        %1015 = vmatpush1.msra.mxu0 0.0
        %1016 = vmatprep.subr.mxu0 0.0
        %1017 = vmatpush1.msra.mxu0 0.0
        %1018 = vmatprep.subr.mxu0 0.0
        %1019 = vmatpush1.msra.mxu0 0.0
        %1020 = vmatprep.subr.mxu0 0.0
        %1021 = vmatpush1.msra.mxu0 0.0
        %1022 = vmatprep.subr.mxu0 0.0
        %1023 = vmatpush1.msra.mxu0 0.0
        %1024 = vmatprep.subr.mxu0 0.0
        %1025 = vmatpush1.msra.mxu0 0.0
        %1026 = vmatprep.subr.mxu0 0.0
        %1027 = vmatpush1.msra.mxu0 0.0
        %1028 = vmatprep.subr.mxu0 0.0
        %1029 = vmatpush1.msra.mxu0 0.0
        %1030 = vmatprep.subr.mxu0 0.0
        %1031 = vmatpush1.msra.mxu0 0.0
        %1032 = vmatprep.subr.mxu0 0.0
        %1033 = vmatpush1.msra.mxu0 0.0
        %1034 = vmatprep.subr.mxu0 0.0
        %1035 = vmatpush1.msra.mxu0 0.0
        %1036 = vmatprep.subr.mxu0 0.0
        %1037 = vmatpush1.msra.mxu0 0.0
        %1038 = vmatprep.subr.mxu0 0.0
        %1039 = vmatpush1.msra.mxu0 0.0
        %1040 = vmatprep.mubr.f32.mxu0 0.0
        %1041 = vmatmul.mubr.f32.gmra.mrb[0].mxu0 %v974
        %v1042 = vpop.f32.mrb[0].mxu0
        %v1043 = vadd.f32 %v971, %v1042
        %v1044 = vpop.f32.mrb[0].mxu0
        %1045 = vdwg.mxu0
        %v1046 = vsel %vm816, %v1043, 0.0
        %1047 = vadd.xlane.f32.xlu0 %v1046
        %v1048 = vpop.xlane.xlu0 %1047
        %v1049 = vmul.f32 %v1048, %v820
        %v1050 = vsub.f32 %v1043, %v1049
        %v1051 = vmul.f32 %v1050, %v1050
        %v1052 = vsel %vm816, %v1051, 0.0
        %1053 = vadd.xlane.f32.xlu0 %v1052
        %v1054 = vpop.xlane.xlu0 %1053
        %v1055 = vmul.f32 %v1054, %v820
        %v1056 = vld [vmem:[%s11] sm:$0x1]
        %v1057 = vadd.f32 %v1055, 1e-05
        %v1058 = vrsqrt.pop %v1057
        %v1060 = vlaneseq
        %v1061 = vshrl.u32 %v1060, 7
        %v1062 = vsub.s32 0, %v1061
        %v1063 = vrot.slane %v1056, %v1062
        %v1065 = vmul.f32 %v1063, %v1058
        %v1066 = vmul.f32 %v1050, %v1065
        %v1067 = vld [vmem:[%s12] sm:$0x1]
        %v1069 = vlaneseq
        %v1070 = vshrl.u32 %v1069, 7
        %v1071 = vsub.s32 0, %v1070
        %v1072 = vrot.slane %v1067, %v1071
        %v1074 = vadd.f32 %v1066, %v1072
        %v1075 = vmax.f32 %v1074, 0.0
        %v1076 = vld [vmem:[%s13] sm:$0xff]
        %v1077 = vld [vmem:[%s13 + $0x8] sm:$0xff]
        %v1078 = vld [vmem:[%s13 + $0x10] sm:$0xff]
        %v1079 = vld [vmem:[%s13 + $0x18] sm:$0xff]
        %v1080 = vld [vmem:[%s14] sm:$0x1]
        %v1082 = vlaneseq
        %v1083 = vshrl.u32 %v1082, 7
        %v1084 = vsub.s32 0, %v1083
        %v1085 = vrot.slane %v1080, %v1084
        %v1088 = vsel %vm816, %v1075, 0
        %1090 = vmatprep.subr.mxu0 0.0
        %1091 = vmatpush1.msra.mxu0 %v1076
        %1092 = vmatprep.subr.mxu0 0.0
        %1093 = vmatpush1.msra.mxu0 %v1077
        %1094 = vmatprep.subr.mxu0 0.0
        %1095 = vmatpush1.msra.mxu0 %v1078
        %1096 = vmatprep.subr.mxu0 0.0
        %1097 = vmatpush1.msra.mxu0 %v1079
        %1098 = vmatprep.subr.mxu0 0.0
        %1099 = vmatpush1.msra.mxu0 0.0
        %1100 = vmatprep.subr.mxu0 0.0
        %1101 = vmatpush1.msra.mxu0 0.0
        %1102 = vmatprep.subr.mxu0 0.0
        %1103 = vmatpush1.msra.mxu0 0.0
        %1104 = vmatprep.subr.mxu0 0.0
        %1105 = vmatpush1.msra.mxu0 0.0
        %1106 = vmatprep.subr.mxu0 0.0
        %1107 = vmatpush1.msra.mxu0 0.0
        %1108 = vmatprep.subr.mxu0 0.0
        %1109 = vmatpush1.msra.mxu0 0.0
        %1110 = vmatprep.subr.mxu0 0.0
        %1111 = vmatpush1.msra.mxu0 0.0
        %1112 = vmatprep.subr.mxu0 0.0
        %1113 = vmatpush1.msra.mxu0 0.0
        %1114 = vmatprep.subr.mxu0 0.0
        %1115 = vmatpush1.msra.mxu0 0.0
        %1116 = vmatprep.subr.mxu0 0.0
        %1117 = vmatpush1.msra.mxu0 0.0
        %1118 = vmatprep.subr.mxu0 0.0
        %1119 = vmatpush1.msra.mxu0 0.0
        %1120 = vmatprep.subr.mxu0 0.0
        %1121 = vmatpush1.msra.mxu0 0.0
        %1122 = vmatprep.subr.mxu0 0.0
        %1123 = vmatpush1.msra.mxu0 0.0
        %1124 = vmatprep.subr.mxu0 0.0
        %1125 = vmatpush1.msra.mxu0 0.0
        %1126 = vmatprep.subr.mxu0 0.0
        %1127 = vmatpush1.msra.mxu0 0.0
        %1128 = vmatprep.subr.mxu0 0.0
        %1129 = vmatpush1.msra.mxu0 0.0
        %1130 = vmatprep.subr.mxu0 0.0
        %1131 = vmatpush1.msra.mxu0 0.0
        %1132 = vmatprep.subr.mxu0 0.0
        %1133 = vmatpush1.msra.mxu0 0.0
        %1134 = vmatprep.subr.mxu0 0.0
        %1135 = vmatpush1.msra.mxu0 0.0
        %1136 = vmatprep.subr.mxu0 0.0
        %1137 = vmatpush1.msra.mxu0 0.0
        %1138 = vmatprep.subr.mxu0 0.0
        %1139 = vmatpush1.msra.mxu0 0.0
        %1140 = vmatprep.subr.mxu0 0.0
        %1141 = vmatpush1.msra.mxu0 0.0
        %1142 = vmatprep.subr.mxu0 0.0
        %1143 = vmatpush1.msra.mxu0 0.0
        %1144 = vmatprep.subr.mxu0 0.0
        %1145 = vmatpush1.msra.mxu0 0.0
        %1146 = vmatprep.subr.mxu0 0.0
        %1147 = vmatpush1.msra.mxu0 0.0
        %1148 = vmatprep.subr.mxu0 0.0
        %1149 = vmatpush1.msra.mxu0 0.0
        %1150 = vmatprep.subr.mxu0 0.0
        %1151 = vmatpush1.msra.mxu0 0.0
        %1152 = vmatprep.subr.mxu0 0.0
        %1153 = vmatpush1.msra.mxu0 0.0
        %1154 = vmatprep.mubr.f32.mxu0 0.0
        %1155 = vmatmul.mubr.f32.gmra.mrb[0].mxu0 %v1088
        %v1156 = vpop.f32.mrb[0].mxu0
        %v1157 = vadd.f32 %v1085, %v1156
        %v1158 = vpop.f32.mrb[0].mxu0
        %1159 = vdwg.mxu0
        %v1160 = vsel %vm816, %v1157, 0.0
        %1161 = vadd.xlane.f32.xlu0 %v1160
        %v1162 = vpop.xlane.xlu0 %1161
        %v1163 = vmul.f32 %v1162, %v820
        %v1164 = vsub.f32 %v1157, %v1163
        %v1165 = vmul.f32 %v1164, %v1164
        %v1166 = vsel %vm816, %v1165, 0.0
        %1167 = vadd.xlane.f32.xlu0 %v1166
        %v1168 = vpop.xlane.xlu0 %1167
        %v1169 = vmul.f32 %v1168, %v820
        %v1170 = vld [vmem:[%s15] sm:$0x1]
        %v1171 = vadd.f32 %v1169, 1e-05
        %v1172 = vrsqrt.pop %v1171
        %v1174 = vlaneseq
        %v1175 = vshrl.u32 %v1174, 7
        %v1176 = vsub.s32 0, %v1175
        %v1177 = vrot.slane %v1170, %v1176
        %v1179 = vmul.f32 %v1177, %v1172
        %v1180 = vmul.f32 %v1164, %v1179
        %v1181 = vld [vmem:[%s16] sm:$0x1]
        %v1183 = vlaneseq
        %v1184 = vshrl.u32 %v1183, 7
        %v1185 = vsub.s32 0, %v1184
        %v1186 = vrot.slane %v1181, %v1185
        %v1188 = vadd.f32 %v1180, %v1186
        %v1189 = vmax.f32 %v1188, 0.0
        %v1190 = vld [vmem:[%s17] sm:$0xff]
        %v1191 = vld [vmem:[%s17 + $0x8] sm:$0xff]
        %v1192 = vld [vmem:[%s17 + $0x10] sm:$0xff]
        %v1193 = vld [vmem:[%s17 + $0x18] sm:$0xff]
        %v1194 = vld [vmem:[%s18] sm:$0x1]
        %v1196 = vlaneseq
        %v1197 = vshrl.u32 %v1196, 7
        %v1198 = vsub.s32 0, %v1197
        %v1199 = vrot.slane %v1194, %v1198
        %v1202 = vsel %vm816, %v1189, 0
        %1204 = vmatprep.subr.mxu0 0.0
        %1205 = vmatpush1.msra.mxu0 %v1190
        %1206 = vmatprep.subr.mxu0 0.0
        %1207 = vmatpush1.msra.mxu0 %v1191
        %1208 = vmatprep.subr.mxu0 0.0
        %1209 = vmatpush1.msra.mxu0 %v1192
        %1210 = vmatprep.subr.mxu0 0.0
        %1211 = vmatpush1.msra.mxu0 %v1193
        %1212 = vmatprep.subr.mxu0 0.0
        %1213 = vmatpush1.msra.mxu0 0.0
        %1214 = vmatprep.subr.mxu0 0.0
        %1215 = vmatpush1.msra.mxu0 0.0
        %1216 = vmatprep.subr.mxu0 0.0
        %1217 = vmatpush1.msra.mxu0 0.0
        %1218 = vmatprep.subr.mxu0 0.0
        %1219 = vmatpush1.msra.mxu0 0.0
        %1220 = vmatprep.subr.mxu0 0.0
        %1221 = vmatpush1.msra.mxu0 0.0
        %1222 = vmatprep.subr.mxu0 0.0
        %1223 = vmatpush1.msra.mxu0 0.0
        %1224 = vmatprep.subr.mxu0 0.0
        %1225 = vmatpush1.msra.mxu0 0.0
        %1226 = vmatprep.subr.mxu0 0.0
        %1227 = vmatpush1.msra.mxu0 0.0
        %1228 = vmatprep.subr.mxu0 0.0
        %1229 = vmatpush1.msra.mxu0 0.0
        %1230 = vmatprep.subr.mxu0 0.0
        %1231 = vmatpush1.msra.mxu0 0.0
        %1232 = vmatprep.subr.mxu0 0.0
        %1233 = vmatpush1.msra.mxu0 0.0
        %1234 = vmatprep.subr.mxu0 0.0
        %1235 = vmatpush1.msra.mxu0 0.0
        %1236 = vmatprep.subr.mxu0 0.0
        %1237 = vmatpush1.msra.mxu0 0.0
        %1238 = vmatprep.subr.mxu0 0.0
        %1239 = vmatpush1.msra.mxu0 0.0
        %1240 = vmatprep.subr.mxu0 0.0
        %1241 = vmatpush1.msra.mxu0 0.0
        %1242 = vmatprep.subr.mxu0 0.0
        %1243 = vmatpush1.msra.mxu0 0.0
        %1244 = vmatprep.subr.mxu0 0.0
        %1245 = vmatpush1.msra.mxu0 0.0
        %1246 = vmatprep.subr.mxu0 0.0
        %1247 = vmatpush1.msra.mxu0 0.0
        %1248 = vmatprep.subr.mxu0 0.0
        %1249 = vmatpush1.msra.mxu0 0.0
        %1250 = vmatprep.subr.mxu0 0.0
        %1251 = vmatpush1.msra.mxu0 0.0
        %1252 = vmatprep.subr.mxu0 0.0
        %1253 = vmatpush1.msra.mxu0 0.0
        %1254 = vmatprep.subr.mxu0 0.0
        %1255 = vmatpush1.msra.mxu0 0.0
        %1256 = vmatprep.subr.mxu0 0.0
        %1257 = vmatpush1.msra.mxu0 0.0
        %1258 = vmatprep.subr.mxu0 0.0
        %1259 = vmatpush1.msra.mxu0 0.0
        %1260 = vmatprep.subr.mxu0 0.0
        %1261 = vmatpush1.msra.mxu0 0.0
        %1262 = vmatprep.subr.mxu0 0.0
        %1263 = vmatpush1.msra.mxu0 0.0
        %1264 = vmatprep.subr.mxu0 0.0
        %1265 = vmatpush1.msra.mxu0 0.0
        %1266 = vmatprep.subr.mxu0 0.0
        %1267 = vmatpush1.msra.mxu0 0.0
        %1268 = vmatprep.mubr.f32.mxu0 0.0
        %1269 = vmatmul.mubr.f32.gmra.mrb[0].mxu0 %v1202
        %v1270 = vpop.f32.mrb[0].mxu0
        %v1271 = vadd.f32 %v1199, %v1270
        %v1272 = vpop.f32.mrb[0].mxu0
        %1273 = vdwg.mxu0
        %1274 = vst [vmem:[%s595] sm:$0xff] %v1271
        %s1275 = sand.u32 %s445, 1
        %s1276 = scalar_lea.sflag [#allocation3], %s1275
        %s1277 = sand.u32 %s445, 1
        %s1278 = smul.addr %s1277, 8
        %s1279 = scalar_lea.vmem [#allocation2], %s1278
        // Predicated region
        $region97: #{tpu_custom_call.1} parent=95 // pred_check
          %p1280 = pneg %p455
        $region98: #{tpu_custom_call.1} parent=95 // pred_check_branch
          %1282 = sbr.rel (%p1280) target = $region100
        $region99: #{tpu_custom_call.1} parent=95 // pred_region
          %s1284 = ssub.s32 128, 128
          %1285 = vsyncadd %s1276, %s1284
          %s1286 = smul.addr %s33, 128
          %s1287 = scalar_lea.hbm %s19, %s1286
          %s1289 = sshll.u32 %s1279, 4
          %s1290 = int_to_ptr.vmem [resolvable:$true] %s1289
          %1292 = dma.vmem_to_hbm [thread:$0]  %s1290, 128, %s1287, %s1276
        $region100: #{tpu_custom_call.1} parent=95 // pred_fallthru
          _
      $region96: #{tpu_custom_call.1} parent=5 // pred_fallthru
        _
      %p1293 = scmp.le.s32.totalorder 2, %s28
      // Predicated region
      $region101: #{tpu_custom_call.1} parent=5 // pred_check
        %p1294 = pneg %p1293
      $region102: #{tpu_custom_call.1} parent=5 // pred_check_branch
        %1296 = sbr.rel (%p1294) target = $region104
      $region103: #{tpu_custom_call.1} parent=5 // pred_region
        %s1297 = ssub.s32 %s28, 2
        // Predicated region
        $region105: #{tpu_custom_call.1} parent=103 // pred_check
          %p1298 = pneg %p461
        $region106: #{tpu_custom_call.1} parent=103 // pred_check_branch
          %1300 = sbr.rel (%p1298) target = $region108
        $region107: #{tpu_custom_call.1} parent=103 // pred_region
          %s1301 = sand.u32 %s446, 1
          %s1302 = scalar_lea.sflag [#allocation3], %s1301
          %s1303 = sand.u32 %s446, 1
          %s1304 = smul.addr %s1303, 8
          %s1305 = scalar_lea.vmem [#allocation2], %s1304
          %1306 = dma.done %s1302, 128
        $region108: #{tpu_custom_call.1} parent=103 // pred_fallthru
          _
      $region104: #{tpu_custom_call.1} parent=5 // pred_fallthru
        _
    $region6: #{tpu_custom_call.1} parent=1 // loop_footer
      %s32 = sadd.s32 1, %s28
    $region7: #{tpu_custom_call.1} parent=1 // loop_footer_branch
      %27 = sbr.rel target = $region3
    $region8: #{tpu_custom_call.1} parent=1 // loop_exit
      _
    %1307 = vsyncpa [#allocation3], 1
    %s1308 = scalar_lea.sflag [#allocation3], 1
    %1309 = vsyncpa %s1308, 1

</llo_original>
